<compile_context>
chip_gen: v7x
topology: tpu7x:2x2x1
jax: 0.10.0
libtpu: 0.0.40
codegen_flags: <defaults>
</compile_context>

<pallas_src>
import jax
import jax.numpy as jnp
from jax.experimental import pallas as pl
from jax.experimental.pallas import tpu as pltpu

# ---- problem sizes (small, consistent with the module's forward) ----
B = 8                    # batch
C_IN, H_IN, W_IN = 3, 16, 16
D_IN = C_IN * H_IN * W_IN            # 768
HIDDEN = 64
NUM_CLASS = 16           # args.num_class
LOW_DIM = 32             # args.low_dim
HEAD_DIM = NUM_CLASS + LOW_DIM       # fused [class | projection] head width
MOCO_QUEUE = 64          # args.moco_queue
PROTO_M = 0.99           # args.proto_m
MOCO_M = 0.999           # args.moco_m
EPS = 1e-12              # F.normalize eps
SLAB_W = 128             # lane-dense output slab width

# packed per-encoder parameter layout: (P_ROWS, P_COLS) f32, all section
# breaks are multiples of 8 sublanes so every in-kernel slice is tile-aligned.
ROW_W1 = 0                      # rows [0, 768)      : w1 (D_IN, HIDDEN)
ROW_B1 = D_IN                   # row  768           : b1 (1, HIDDEN)
ROW_WH = D_IN + 8               # rows [776, 840)    : wh (HIDDEN, HEAD_DIM)
ROW_BH = ROW_WH + HIDDEN        # row  840           : bh (1, HEAD_DIM)
P_ROWS = ROW_BH + 8             # 848 (padded to multiple of 8)
P_COLS = HIDDEN                 # 64 lanes (HEAD_DIM rows use lanes [:48])

# slab column layout
_OUT_LO, _OUT_HI = 0, NUM_CLASS                       # 0:16   output logits
_Q_LO, _Q_HI = _OUT_HI, _OUT_HI + LOW_DIM             # 16:48  q
_K_LO, _K_HI = _Q_HI, _Q_HI + LOW_DIM                 # 48:80  k (unshuffled)
_SP_LO, _SP_HI = _K_HI, _K_HI + NUM_CLASS             # 80:96  score_prot
_DIST_COL = _SP_HI                                    # 96     distance_prot
_PSEUDO_COL = _SP_HI + 1                              # 97     pseudo label
_PAD_W = SLAB_W - (_PSEUDO_COL + 1)                   # 30 padding lanes


def pack_encoder_params(w1, b1, wh, bh):
    """Pack one encoder's params into a single (P_ROWS, P_COLS) f32 buffer."""
    pad_w = P_COLS - HEAD_DIM
    return jnp.concatenate([
        w1,                                                       # 0..767
        b1,                                                       # 768
        jnp.zeros((ROW_WH - ROW_B1 - 1, P_COLS), jnp.float32),    # pad
        jnp.pad(wh, ((0, 0), (0, pad_w))),                        # 776..839
        jnp.pad(bh, ((0, 0), (0, pad_w))),                        # 840
        jnp.zeros((P_ROWS - ROW_BH - 1, P_COLS), jnp.float32),    # pad
    ], axis=0)


# ---------------------------------------------------------------------------
# Fused Pallas kernel: key-encoder momentum update + encoder_q + encoder_k +
# PiCO_PLUS head + in-kernel batch unshuffle + sequential prototype update.
# ---------------------------------------------------------------------------
def _pico_fused_kernel(xq_ref, xk_ref, pq_ref, pk_ref,
                       y_ref, protos_ref, rel_ref, unshuf_ref,
                       slab_ref, protos_out_ref, pk_out_ref):
    # ---- momentum update of the key-encoder params, written straight to the
    # (aliased) output ref; the k-path matmuls read from this ref so no second
    # VMEM staging copy of the updated weights is materialized.
    pk_out_ref[...] = MOCO_M * pk_ref[...] + (1.0 - MOCO_M) * pq_ref[...]

    # ---- encoder_q: fc -> relu -> fused [class | projection] head
    hq = jnp.maximum(
        jnp.dot(xq_ref[...], pq_ref[ROW_W1:ROW_W1 + D_IN, :],
                preferred_element_type=jnp.float32)
        + pq_ref[ROW_B1:ROW_B1 + 1, :], 0.0)
    yq = (jnp.dot(hq, pq_ref[ROW_WH:ROW_WH + HIDDEN, :HEAD_DIM],
                  preferred_element_type=jnp.float32)
          + pq_ref[ROW_BH:ROW_BH + 1, :HEAD_DIM])
    output = yq[:, :NUM_CLASS]
    fq = yq[:, NUM_CLASS:]
    q = fq * jax.lax.rsqrt(jnp.maximum(
        jnp.sum(fq * fq, axis=1, keepdims=True), EPS * EPS))       # F.normalize

    # ---- encoder_k using the momentum params read back from the output ref
    hk = jnp.maximum(
        jnp.dot(xk_ref[...], pk_out_ref[ROW_W1:ROW_W1 + D_IN, :],
                preferred_element_type=jnp.float32)
        + pk_out_ref[ROW_B1:ROW_B1 + 1, :], 0.0)
    yk = (jnp.dot(hk, pk_out_ref[ROW_WH:ROW_WH + HIDDEN, :HEAD_DIM],
                  preferred_element_type=jnp.float32)
          + pk_out_ref[ROW_BH:ROW_BH + 1, :HEAD_DIM])
    fk = yk[:, NUM_CLASS:]
    k = fk * jax.lax.rsqrt(jnp.maximum(
        jnp.sum(fk * fk, axis=1, keepdims=True), EPS * EPS))
    # undo the DDP batch shuffle inside the kernel (one-hot permutation matmul)
    k = jnp.dot(unshuf_ref[...], k, preferred_element_type=jnp.float32)

    # ---- pseudo label: argmax over softmax(output) * Y_ori.  The softmax's
    # positive per-row scale never changes the argmax, so normalisation is
    # dropped (predicted_scores itself is not a returned tensor).
    lmax = jnp.max(output, axis=1, keepdims=True)
    masked = jnp.exp(output - lmax) * y_ref[...]
    iota_c = jax.lax.broadcasted_iota(jnp.int32, masked.shape, 1)
    mmax = jnp.max(masked, axis=1, keepdims=True)
    # torch.max returns the FIRST maximal index -> min index where val == max
    within = jnp.min(jnp.where(masked == mmax, iota_c, NUM_CLASS),
                     axis=1, keepdims=True)                        # (B,1) int32

    # ---- prototype head (uses prototypes BEFORE their update, as in torch)
    protos_old = protos_ref[...]
    lp = jax.lax.dot_general(q, protos_old, (((1,), (1,)), ((), ())),
                             preferred_element_type=jnp.float32)   # q @ P.T
    lp_m = jnp.max(lp, axis=1, keepdims=True)
    lp_e = jnp.exp(lp - lp_m)
    score_prot = lp_e / jnp.sum(lp_e, axis=1, keepdims=True)       # exact softmax

    # distance_prot = -(q * prototypes[within]).sum(1) == -lp[i, within_i]
    onehot = (iota_c == within).astype(jnp.float32)                # (B, NUM_CLASS)
    dist = -jnp.sum(lp * onehot, axis=1, keepdims=True)            # (B, 1)

    # ---- sequential prototype momentum update (exact chained semantics over
    #      reliable samples, in batch order), then L2 row-normalisation
    iota_nc = jax.lax.broadcasted_iota(jnp.int32, (NUM_CLASS, 1), 0)
    protos_new = protos_old
    for i in range(B):                                 # B is small and static
        wi = within[i:i + 1, :]                        # (1,1) pseudo label
        ri = rel_ref[i:i + 1, :]                       # (1,1) reliability
        gate = jnp.logical_and(iota_nc == wi, ri > 0.5)            # (NUM_CLASS,1)
        qi = q[i:i + 1, :]                                         # (1, LOW_DIM)
        protos_new = jnp.where(
            gate, PROTO_M * protos_new + (1.0 - PROTO_M) * qi, protos_new)
    protos_out_ref[...] = protos_new * jax.lax.rsqrt(jnp.maximum(
        jnp.sum(protos_new * protos_new, axis=1, keepdims=True), EPS * EPS))

    # ---- single lane-dense (B, 128) slab: assembled in registers, one
    #      unmasked full-width store.
    slab = jnp.concatenate(
        [output, q, k, score_prot, dist, within.astype(jnp.float32),
         jnp.zeros((B, _PAD_W), jnp.float32)], axis=1)
    slab_ref[...] = slab


def _pico_step_call(xq, xk, pq, pk, Y_ori, prototypes, rel_f, unshuf):
    vmem = pl.BlockSpec(memory_space=pltpu.MemorySpace.VMEM)
    return pl.pallas_call(
        _pico_fused_kernel,
        out_shape=(
            jax.ShapeDtypeStruct((B, SLAB_W), jnp.float32),           # slab
            jax.ShapeDtypeStruct((NUM_CLASS, LOW_DIM), jnp.float32),  # protos
            jax.ShapeDtypeStruct((P_ROWS, P_COLS), jnp.float32),      # k params
        ),
        in_specs=[vmem] * 8,
        out_specs=(vmem, vmem, vmem),
        # in-place: key-encoder params -> updated params, prototypes -> updated
        input_output_aliases={3: 2, 5: 1},
    )(xq, xk, pq, pk, Y_ori, prototypes, rel_f, unshuf)


# ---------------------------------------------------------------------------
# Full PiCO_PLUS forward (state-carrying, functional version of the module)
# ---------------------------------------------------------------------------
def pico_plus_forward(img_q, im_k, Y_ori, is_rel, state, shuffle_key):
    # DDP batch shuffle / unshuffle: on a single device this is a deterministic
    # permutation (mathematically identity for a per-sample encoder).
    idx_shuffle = jax.random.permutation(shuffle_key, B)
    idx_unshuffle = jnp.argsort(idx_shuffle)
    unshuf = jax.nn.one_hot(idx_unshuffle, B, dtype=jnp.float32)   # (B,B)

    xq = img_q.reshape(B, -1)
    xk = im_k[idx_shuffle].reshape(B, -1)
    rel_f = is_rel.astype(jnp.float32).reshape(B, 1)

    slab, protos_new, pk_new = _pico_step_call(
        xq, xk, state["params_q"], state["params_k"], Y_ori,
        state["prototypes"], rel_f, unshuf)

    output = slab[:, _OUT_LO:_OUT_HI]
    q = slab[:, _Q_LO:_Q_HI]
    k = slab[:, _K_LO:_K_HI]                 # already unshuffled in-kernel
    score_prot = slab[:, _SP_LO:_SP_HI]
    distance_prot = slab[:, _DIST_COL]
    pseudo_f = slab[:, _PSEUDO_COL]

    # concatenations use the queue BEFORE enqueue (as in the module)
    features = jnp.concatenate([q, k, state["queue"]], axis=0)
    pseudo_labels = jnp.concatenate(
        [pseudo_f, pseudo_f, state["queue_pseudo"]], axis=0)
    is_rel_queue = jnp.concatenate([is_rel, is_rel, state["queue_rel"]], axis=0)

    # _dequeue_and_enqueue (single device: all_gather is identity)
    ptr = state["queue_ptr"]
    queue = jax.lax.dynamic_update_slice(state["queue"], k, (ptr, 0))
    queue_pseudo = jax.lax.dynamic_update_slice(
        state["queue_pseudo"], pseudo_f, (ptr,))
    queue_rel = jax.lax.dynamic_update_slice(state["queue_rel"], is_rel, (ptr,))
    new_ptr = (ptr + B) % MOCO_QUEUE

    new_state = dict(state, params_k=pk_new, prototypes=protos_new,
                     queue=queue, queue_pseudo=queue_pseudo,
                     queue_rel=queue_rel, queue_ptr=new_ptr)
    outputs = (output, features, pseudo_labels, score_prot, distance_prot,
               is_rel_queue)
    return outputs, new_state


# ---------------------------------------------------------------------------
# Deterministic init + run
# ---------------------------------------------------------------------------
def init_state(key):
    ks = jax.random.split(key, 5)
    w1 = 0.02 * jax.random.normal(ks[0], (D_IN, HIDDEN), jnp.float32)
    wc = 0.02 * jax.random.normal(ks[1], (HIDDEN, NUM_CLASS), jnp.float32)
    wf = 0.02 * jax.random.normal(ks[2], (HIDDEN, LOW_DIM), jnp.float32)
    b1 = jnp.zeros((1, HIDDEN), jnp.float32)
    wh = jnp.concatenate([wc, wf], axis=1)     # fused [class | projection]
    bh = jnp.zeros((1, HEAD_DIM), jnp.float32)

    params_q = pack_encoder_params(w1, b1, wh, bh)
    params_k = jnp.copy(params_q)              # encoder_k starts as copy of q

    queue = jax.random.normal(ks[3], (MOCO_QUEUE, LOW_DIM), jnp.float32)
    # PiCO normalizes the queue along dim=0 at init
    queue = queue / jnp.maximum(
        jnp.sqrt(jnp.sum(queue * queue, axis=0, keepdims=True)), EPS)
    queue_pseudo = jax.random.normal(ks[4], (MOCO_QUEUE,), jnp.float32)
    queue_rel = jnp.zeros((MOCO_QUEUE,), jnp.bool_)
    prototypes = jnp.zeros((NUM_CLASS, LOW_DIM), jnp.float32)
    queue_ptr = jnp.zeros((), jnp.int32)

    return {
        "params_q": params_q, "params_k": params_k,
        "queue": queue, "queue_pseudo": queue_pseudo, "queue_rel": queue_rel,
        "prototypes": prototypes, "queue_ptr": queue_ptr,
    }


if __name__ == "__main__":
    key = jax.random.PRNGKey(0)
    k_state, k_q, k_k, k_y, k_lbl, k_rel, k_shuf = jax.random.split(key, 7)

    state = init_state(k_state)

    img_q = jax.random.normal(k_q, (B, C_IN, H_IN, W_IN), jnp.float32)
    im_k = jax.random.normal(k_k, (B, C_IN, H_IN, W_IN), jnp.float32)

    # partial-label matrix Y_ori: random candidate sets + guaranteed true label
    true_lbl = jax.random.randint(k_lbl, (B,), 0, NUM_CLASS)
    Y_ori = (jax.random.uniform(k_y, (B, NUM_CLASS)) < 0.3).astype(jnp.float32)
    Y_ori = jnp.maximum(Y_ori, jax.nn.one_hot(true_lbl, NUM_CLASS,
                                              dtype=jnp.float32))
    is_rel = jax.random.uniform(k_rel, (B,)) < 0.7            # bool reliability

    fwd = jax.jit(pico_plus_forward, donate_argnums=(4,))     # donate state
    (output, features, pseudo_labels, score_prot, distance_prot,
     is_rel_queue), new_state = fwd(img_q, im_k, Y_ori, is_rel, state, k_shuf)
    jax.block_until_ready((output, features, pseudo_labels, score_prot,
                           distance_prot, is_rel_queue, new_state))

    # sanity on shapes implied by the module
    assert output.shape == (B, NUM_CLASS)
    assert features.shape == (2 * B + MOCO_QUEUE, LOW_DIM)
    assert pseudo_labels.shape == (2 * B + MOCO_QUEUE,)
    assert score_prot.shape == (B, NUM_CLASS)
    assert distance_prot.shape == (B,)
    assert is_rel_queue.shape == (2 * B + MOCO_QUEUE,)
    assert is_rel_queue.dtype == jnp.bool_
    assert new_state["prototypes"].shape == (NUM_CLASS, LOW_DIM)
    assert new_state["params_k"].shape == (P_ROWS, P_COLS)
    assert bool(jnp.all(jnp.isfinite(features)))
    assert bool(jnp.all(jnp.isfinite(score_prot)))
    assert bool(jnp.all(jnp.isfinite(new_state["prototypes"])))

    # TODO(synk): concat_all_gather / DDP batch shuffle are multi-device
    # collectives; on a single device they reduce to identity / a deterministic
    # permutation, which is what is implemented here.
    print("KERNEL_OK")
</pallas_src>

<mosaic_0001>
module attributes {stable_mosaic.version = 11 : i64} {
  func.func @_pico_fused_kernel(%arg0: memref<8x768xf32, #tpu.memory_space<vmem>>, %arg1: memref<8x768xf32, #tpu.memory_space<vmem>>, %arg2: memref<848x64xf32, #tpu.memory_space<vmem>>, %arg3: memref<848x64xf32, #tpu.memory_space<vmem>>, %arg4: memref<8x16xf32, #tpu.memory_space<vmem>>, %arg5: memref<16x32xf32, #tpu.memory_space<vmem>>, %arg6: memref<8x1xf32, #tpu.memory_space<vmem>>, %arg7: memref<8x8xf32, #tpu.memory_space<vmem>>, %arg8: memref<8x128xf32, #tpu.memory_space<vmem>>, %arg9: memref<16x32xf32, #tpu.memory_space<vmem>>, %arg10: memref<848x64xf32, #tpu.memory_space<vmem>>) attributes {dimension_semantics = [], scalar_prefetch = 0 : i64, scratch_operands = 0 : i64, tpu.core_type = #tpu.core_type<tc>} {
    %c0 = arith.constant 0 : index
    %c0_0 = arith.constant 0 : index
    %0 = vector.load %arg3[%c0, %c0_0] : memref<848x64xf32, #tpu.memory_space<vmem>>, vector<848x64xf32>
    %cst = arith.constant 9.990000e-01 : f32
    %1 = vector.broadcast %cst : f32 to vector<848x64xf32>
    %2 = arith.mulf %1, %0 : vector<848x64xf32>
    %c0_1 = arith.constant 0 : index
    %c0_2 = arith.constant 0 : index
    %3 = vector.load %arg2[%c0_1, %c0_2] : memref<848x64xf32, #tpu.memory_space<vmem>>, vector<848x64xf32>
    %cst_3 = arith.constant 1.000000e-03 : f32
    %4 = vector.broadcast %cst_3 : f32 to vector<848x64xf32>
    %5 = arith.mulf %4, %3 : vector<848x64xf32>
    %6 = arith.addf %2, %5 : vector<848x64xf32>
    %c0_4 = arith.constant 0 : index
    %c0_5 = arith.constant 0 : index
    %7 = vector.load %arg10[%c0_4, %c0_5] : memref<848x64xf32, #tpu.memory_space<vmem>>, vector<848x64xf32>
    tpu.vector_store %arg10[%c0_4, %c0_5], %6 {strides = array<i32>} : memref<848x64xf32, #tpu.memory_space<vmem>>, vector<848x64xf32>,
    %c0_6 = arith.constant 0 : index
    %c0_7 = arith.constant 0 : index
    %8 = vector.load %arg0[%c0_6, %c0_7] : memref<8x768xf32, #tpu.memory_space<vmem>>, vector<8x768xf32>
    %c0_8 = arith.constant 0 : index
    %c0_9 = arith.constant 0 : index
    %9 = vector.load %arg2[%c0_8, %c0_9] : memref<848x64xf32, #tpu.memory_space<vmem>>, vector<768x64xf32>
    %cst_10 = arith.constant dense<0.000000e+00> : vector<8x64xf32>
    %10 = tpu.matmul %8, %9, %cst_10 {dimension_numbers = #tpu.dot_dimension_numbers<[1], [0], [0], [1], [0, 0, 1, 1], [], []>} : vector<8x768xf32>, vector<768x64xf32>, vector<8x64xf32> -> vector<8x64xf32>
    %c768 = arith.constant 768 : index
    %c0_11 = arith.constant 0 : index
    %11 = vector.load %arg2[%c768, %c0_11] : memref<848x64xf32, #tpu.memory_space<vmem>>, vector<1x64xf32>
    %12 = vector.broadcast %11 : vector<1x64xf32> to vector<8x64xf32>
    %13 = arith.addf %10, %12 : vector<8x64xf32>
    %cst_12 = arith.constant 0.000000e+00 : f32
    %14 = vector.broadcast %cst_12 : f32 to vector<8x64xf32>
    %15 = arith.maximumf %13, %14 : vector<8x64xf32>
    %c776 = arith.constant 776 : index
    %c0_13 = arith.constant 0 : index
    %16 = vector.load %arg2[%c776, %c0_13] : memref<848x64xf32, #tpu.memory_space<vmem>>, vector<64x48xf32>
    %cst_14 = arith.constant dense<0.000000e+00> : vector<8x48xf32>
    %17 = tpu.matmul %15, %16, %cst_14 {dimension_numbers = #tpu.dot_dimension_numbers<[1], [0], [0], [1], [0, 0, 1, 1], [], []>} : vector<8x64xf32>, vector<64x48xf32>, vector<8x48xf32> -> vector<8x48xf32>
    %c840 = arith.constant 840 : index
    %c0_15 = arith.constant 0 : index
    %18 = vector.load %arg2[%c840, %c0_15] : memref<848x64xf32, #tpu.memory_space<vmem>>, vector<1x48xf32>
    %19 = vector.broadcast %18 : vector<1x48xf32> to vector<8x48xf32>
    %20 = arith.addf %17, %19 : vector<8x48xf32>
    %21 = vector.extract_strided_slice %20 {offsets = [0, 0], sizes = [8, 16], strides = [1, 1]} : vector<8x48xf32> to vector<8x16xf32>
    %22 = vector.extract_strided_slice %20 {offsets = [0, 16], sizes = [8, 32], strides = [1, 1]} : vector<8x48xf32> to vector<8x32xf32>
    %23 = arith.mulf %22, %22 : vector<8x32xf32>
    %cst_16 = arith.constant dense<0.000000e+00> : vector<8xf32>
    %24 = vector.multi_reduction <add>, %23, %cst_16 [1] : vector<8x32xf32> to vector<8xf32>
    %25 = vector.shape_cast %24 : vector<8xf32> to vector<8x1xf32>
    %cst_17 = arith.constant 1.000000e-24 : f32
    %26 = vector.broadcast %cst_17 : f32 to vector<8x1xf32>
    %27 = arith.maximumf %25, %26 : vector<8x1xf32>
    %28 = math.rsqrt %27 : vector<8x1xf32>
    %29 = vector.broadcast %28 : vector<8x1xf32> to vector<8x32xf32>
    %30 = arith.mulf %22, %29 : vector<8x32xf32>
    %c0_18 = arith.constant 0 : index
    %c0_19 = arith.constant 0 : index
    %31 = vector.load %arg1[%c0_18, %c0_19] : memref<8x768xf32, #tpu.memory_space<vmem>>, vector<8x768xf32>
    %c0_20 = arith.constant 0 : index
    %c0_21 = arith.constant 0 : index
    %32 = vector.load %arg10[%c0_20, %c0_21] : memref<848x64xf32, #tpu.memory_space<vmem>>, vector<768x64xf32>
    %cst_22 = arith.constant dense<0.000000e+00> : vector<8x64xf32>
    %33 = tpu.matmul %31, %32, %cst_22 {dimension_numbers = #tpu.dot_dimension_numbers<[1], [0], [0], [1], [0, 0, 1, 1], [], []>} : vector<8x768xf32>, vector<768x64xf32>, vector<8x64xf32> -> vector<8x64xf32>
    %c768_23 = arith.constant 768 : index
    %c0_24 = arith.constant 0 : index
    %34 = vector.load %arg10[%c768_23, %c0_24] : memref<848x64xf32, #tpu.memory_space<vmem>>, vector<1x64xf32>
    %35 = vector.broadcast %34 : vector<1x64xf32> to vector<8x64xf32>
    %36 = arith.addf %33, %35 : vector<8x64xf32>
    %cst_25 = arith.constant 0.000000e+00 : f32
    %37 = vector.broadcast %cst_25 : f32 to vector<8x64xf32>
    %38 = arith.maximumf %36, %37 : vector<8x64xf32>
    %c776_26 = arith.constant 776 : index
    %c0_27 = arith.constant 0 : index
    %39 = vector.load %arg10[%c776_26, %c0_27] : memref<848x64xf32, #tpu.memory_space<vmem>>, vector<64x48xf32>
    %cst_28 = arith.constant dense<0.000000e+00> : vector<8x48xf32>
    %40 = tpu.matmul %38, %39, %cst_28 {dimension_numbers = #tpu.dot_dimension_numbers<[1], [0], [0], [1], [0, 0, 1, 1], [], []>} : vector<8x64xf32>, vector<64x48xf32>, vector<8x48xf32> -> vector<8x48xf32>
    %c840_29 = arith.constant 840 : index
    %c0_30 = arith.constant 0 : index
    %41 = vector.load %arg10[%c840_29, %c0_30] : memref<848x64xf32, #tpu.memory_space<vmem>>, vector<1x48xf32>
    %42 = vector.broadcast %41 : vector<1x48xf32> to vector<8x48xf32>
    %43 = arith.addf %40, %42 : vector<8x48xf32>
    %44 = vector.extract_strided_slice %43 {offsets = [0, 16], sizes = [8, 32], strides = [1, 1]} : vector<8x48xf32> to vector<8x32xf32>
    %45 = arith.mulf %44, %44 : vector<8x32xf32>
    %cst_31 = arith.constant dense<0.000000e+00> : vector<8xf32>
    %46 = vector.multi_reduction <add>, %45, %cst_31 [1] : vector<8x32xf32> to vector<8xf32>
    %47 = vector.shape_cast %46 : vector<8xf32> to vector<8x1xf32>
    %cst_32 = arith.constant 1.000000e-24 : f32
    %48 = vector.broadcast %cst_32 : f32 to vector<8x1xf32>
    %49 = arith.maximumf %47, %48 : vector<8x1xf32>
    %50 = math.rsqrt %49 : vector<8x1xf32>
    %51 = vector.broadcast %50 : vector<8x1xf32> to vector<8x32xf32>
    %52 = arith.mulf %44, %51 : vector<8x32xf32>
    %c0_33 = arith.constant 0 : index
    %c0_34 = arith.constant 0 : index
    %53 = vector.load %arg7[%c0_33, %c0_34] : memref<8x8xf32, #tpu.memory_space<vmem>>, vector<8x8xf32>
    %cst_35 = arith.constant dense<0.000000e+00> : vector<8x32xf32>
    %54 = tpu.matmul %53, %52, %cst_35 {dimension_numbers = #tpu.dot_dimension_numbers<[1], [0], [0], [1], [0, 0, 1, 1], [], []>} : vector<8x8xf32>, vector<8x32xf32>, vector<8x32xf32> -> vector<8x32xf32>
    %cst_36 = arith.constant dense<0xFF800000> : vector<8xf32>
    %55 = vector.multi_reduction <maximumf>, %21, %cst_36 [1] : vector<8x16xf32> to vector<8xf32>
    %56 = vector.shape_cast %55 : vector<8xf32> to vector<8x1xf32>
    %57 = vector.broadcast %56 : vector<8x1xf32> to vector<8x16xf32>
    %58 = arith.subf %21, %57 : vector<8x16xf32>
    %59 = math.exp %58 : vector<8x16xf32>
    %c0_37 = arith.constant 0 : index
    %c0_38 = arith.constant 0 : index
    %60 = vector.load %arg4[%c0_37, %c0_38] : memref<8x16xf32, #tpu.memory_space<vmem>>, vector<8x16xf32>
    %61 = arith.mulf %59, %60 : vector<8x16xf32>
    %62 = tpu.iota {dimensions = array<i32: 1>} : vector<8x16xi32>
    %cst_39 = arith.constant dense<0xFF800000> : vector<8xf32>
    %63 = vector.multi_reduction <maximumf>, %61, %cst_39 [1] : vector<8x16xf32> to vector<8xf32>
    %64 = vector.shape_cast %63 : vector<8xf32> to vector<8x1xf32>
    %65 = vector.broadcast %64 : vector<8x1xf32> to vector<8x16xf32>
    %66 = arith.cmpf oeq, %61, %65 : vector<8x16xf32>
    %c16_i32 = arith.constant 16 : i32
    %67 = vector.broadcast %c16_i32 : i32 to vector<8x16xi32>
    %68 = arith.select %66, %62, %67 : vector<8x16xi1>, vector<8x16xi32>
    %cst_40 = arith.constant dense<2147483647> : vector<8xi32>
    %69 = vector.multi_reduction <minsi>, %68, %cst_40 [1] : vector<8x16xi32> to vector<8xi32>
    %70 = vector.shape_cast %69 : vector<8xi32> to vector<8x1xi32>
    %c0_41 = arith.constant 0 : index
    %c0_42 = arith.constant 0 : index
    %71 = vector.load %arg5[%c0_41, %c0_42] : memref<16x32xf32, #tpu.memory_space<vmem>>, vector<16x32xf32>
    %cst_43 = arith.constant dense<0.000000e+00> : vector<8x16xf32>
    %72 = tpu.matmul %30, %71, %cst_43 {dimension_numbers = #tpu.dot_dimension_numbers<[1], [1], [0], [0], [0, 0, 1, 0], [], []>} : vector<8x32xf32>, vector<16x32xf32>, vector<8x16xf32> -> vector<8x16xf32>
    %cst_44 = arith.constant dense<0xFF800000> : vector<8xf32>
    %73 = vector.multi_reduction <maximumf>, %72, %cst_44 [1] : vector<8x16xf32> to vector<8xf32>
    %74 = vector.shape_cast %73 : vector<8xf32> to vector<8x1xf32>
    %75 = vector.broadcast %74 : vector<8x1xf32> to vector<8x16xf32>
    %76 = arith.subf %72, %75 : vector<8x16xf32>
    %77 = math.exp %76 : vector<8x16xf32>
    %cst_45 = arith.constant dense<0.000000e+00> : vector<8xf32>
    %78 = vector.multi_reduction <add>, %77, %cst_45 [1] : vector<8x16xf32> to vector<8xf32>
    %79 = vector.shape_cast %78 : vector<8xf32> to vector<8x1xf32>
    %80 = vector.broadcast %79 : vector<8x1xf32> to vector<8x16xf32>
    %81 = arith.divf %77, %80 : vector<8x16xf32>
    %82 = vector.broadcast %70 : vector<8x1xi32> to vector<8x16xi32>
    %83 = arith.cmpi eq, %62, %82 : vector<8x16xi32>
    %84 = arith.extui %83 : vector<8x16xi1> to vector<8x16xi32>
    %85 = arith.sitofp %84 : vector<8x16xi32> to vector<8x16xf32>
    %86 = arith.mulf %72, %85 : vector<8x16xf32>
    %cst_46 = arith.constant dense<0.000000e+00> : vector<8xf32>
    %87 = vector.multi_reduction <add>, %86, %cst_46 [1] : vector<8x16xf32> to vector<8xf32>
    %88 = vector.shape_cast %87 : vector<8xf32> to vector<8x1xf32>
    %cst_47 = arith.constant 0.000000e+00 : f32
    %89 = vector.broadcast %cst_47 : f32 to vector<8x1xf32>
    %90 = arith.subf %89, %88 : vector<8x1xf32>
    %91 = tpu.iota {dimensions = array<i32: 0>} : vector<16x1xi32>
    %92 = vector.extract_strided_slice %70 {offsets = [0, 0], sizes = [1, 1], strides = [1, 1]} : vector<8x1xi32> to vector<1x1xi32>
    %c0_48 = arith.constant 0 : index
    %c0_49 = arith.constant 0 : index
    %93 = vector.load %arg6[%c0_48, %c0_49] : memref<8x1xf32, #tpu.memory_space<vmem>>, vector<1x1xf32>
    %94 = vector.broadcast %92 : vector<1x1xi32> to vector<16x1xi32>
    %95 = arith.cmpi eq, %91, %94 : vector<16x1xi32>
    %cst_50 = arith.constant 5.000000e-01 : f32
    %96 = vector.broadcast %cst_50 : f32 to vector<1x1xf32>
    %97 = arith.cmpf ogt, %93, %96 : vector<1x1xf32>
    %98 = vector.broadcast %97 : vector<1x1xi1> to vector<16x1xi1>
    %99 = arith.andi %95, %98 : vector<16x1xi1>
    %100 = vector.extract_strided_slice %30 {offsets = [0, 0], sizes = [1, 32], strides = [1, 1]} : vector<8x32xf32> to vector<1x32xf32>
    %cst_51 = arith.constant 9.900000e-01 : f32
    %101 = vector.broadcast %cst_51 : f32 to vector<16x32xf32>
    %102 = arith.mulf %101, %71 : vector<16x32xf32>
    %cst_52 = arith.constant 0.00999999977 : f32
    %103 = vector.broadcast %cst_52 : f32 to vector<1x32xf32>
    %104 = arith.mulf %103, %100 : vector<1x32xf32>
    %105 = vector.broadcast %104 : vector<1x32xf32> to vector<16x32xf32>
    %106 = arith.addf %102, %105 : vector<16x32xf32>
    %107 = vector.shape_cast %99 : vector<16x1xi1> to vector<16x1xi1>
    %108 = vector.broadcast %107 : vector<16x1xi1> to vector<16x32xi1>
    %109 = arith.select %108, %106, %71 : vector<16x32xi1>, vector<16x32xf32>
    %110 = vector.extract_strided_slice %70 {offsets = [1, 0], sizes = [1, 1], strides = [1, 1]} : vector<8x1xi32> to vector<1x1xi32>
    %c1 = arith.constant 1 : index
    %c0_53 = arith.constant 0 : index
    %111 = vector.load %arg6[%c1, %c0_53] : memref<8x1xf32, #tpu.memory_space<vmem>>, vector<1x1xf32>
    %112 = vector.broadcast %110 : vector<1x1xi32> to vector<16x1xi32>
    %113 = arith.cmpi eq, %91, %112 : vector<16x1xi32>
    %cst_54 = arith.constant 5.000000e-01 : f32
    %114 = vector.broadcast %cst_54 : f32 to vector<1x1xf32>
    %115 = arith.cmpf ogt, %111, %114 : vector<1x1xf32>
    %116 = vector.broadcast %115 : vector<1x1xi1> to vector<16x1xi1>
    %117 = arith.andi %113, %116 : vector<16x1xi1>
    %118 = vector.extract_strided_slice %30 {offsets = [1, 0], sizes = [1, 32], strides = [1, 1]} : vector<8x32xf32> to vector<1x32xf32>
    %cst_55 = arith.constant 9.900000e-01 : f32
    %119 = vector.broadcast %cst_55 : f32 to vector<16x32xf32>
    %120 = arith.mulf %119, %109 : vector<16x32xf32>
    %cst_56 = arith.constant 0.00999999977 : f32
    %121 = vector.broadcast %cst_56 : f32 to vector<1x32xf32>
    %122 = arith.mulf %121, %118 : vector<1x32xf32>
    %123 = vector.broadcast %122 : vector<1x32xf32> to vector<16x32xf32>
    %124 = arith.addf %120, %123 : vector<16x32xf32>
    %125 = vector.shape_cast %117 : vector<16x1xi1> to vector<16x1xi1>
    %126 = vector.broadcast %125 : vector<16x1xi1> to vector<16x32xi1>
    %127 = arith.select %126, %124, %109 : vector<16x32xi1>, vector<16x32xf32>
    %128 = vector.extract_strided_slice %70 {offsets = [2, 0], sizes = [1, 1], strides = [1, 1]} : vector<8x1xi32> to vector<1x1xi32>
    %c2 = arith.constant 2 : index
    %c0_57 = arith.constant 0 : index
    %129 = vector.load %arg6[%c2, %c0_57] : memref<8x1xf32, #tpu.memory_space<vmem>>, vector<1x1xf32>
    %130 = vector.broadcast %128 : vector<1x1xi32> to vector<16x1xi32>
    %131 = arith.cmpi eq, %91, %130 : vector<16x1xi32>
    %cst_58 = arith.constant 5.000000e-01 : f32
    %132 = vector.broadcast %cst_58 : f32 to vector<1x1xf32>
    %133 = arith.cmpf ogt, %129, %132 : vector<1x1xf32>
    %134 = vector.broadcast %133 : vector<1x1xi1> to vector<16x1xi1>
    %135 = arith.andi %131, %134 : vector<16x1xi1>
    %136 = vector.extract_strided_slice %30 {offsets = [2, 0], sizes = [1, 32], strides = [1, 1]} : vector<8x32xf32> to vector<1x32xf32>
    %cst_59 = arith.constant 9.900000e-01 : f32
    %137 = vector.broadcast %cst_59 : f32 to vector<16x32xf32>
    %138 = arith.mulf %137, %127 : vector<16x32xf32>
    %cst_60 = arith.constant 0.00999999977 : f32
    %139 = vector.broadcast %cst_60 : f32 to vector<1x32xf32>
    %140 = arith.mulf %139, %136 : vector<1x32xf32>
    %141 = vector.broadcast %140 : vector<1x32xf32> to vector<16x32xf32>
    %142 = arith.addf %138, %141 : vector<16x32xf32>
    %143 = vector.shape_cast %135 : vector<16x1xi1> to vector<16x1xi1>
    %144 = vector.broadcast %143 : vector<16x1xi1> to vector<16x32xi1>
    %145 = arith.select %144, %142, %127 : vector<16x32xi1>, vector<16x32xf32>
    %146 = vector.extract_strided_slice %70 {offsets = [3, 0], sizes = [1, 1], strides = [1, 1]} : vector<8x1xi32> to vector<1x1xi32>
    %c3 = arith.constant 3 : index
    %c0_61 = arith.constant 0 : index
    %147 = vector.load %arg6[%c3, %c0_61] : memref<8x1xf32, #tpu.memory_space<vmem>>, vector<1x1xf32>
    %148 = vector.broadcast %146 : vector<1x1xi32> to vector<16x1xi32>
    %149 = arith.cmpi eq, %91, %148 : vector<16x1xi32>
    %cst_62 = arith.constant 5.000000e-01 : f32
    %150 = vector.broadcast %cst_62 : f32 to vector<1x1xf32>
    %151 = arith.cmpf ogt, %147, %150 : vector<1x1xf32>
    %152 = vector.broadcast %151 : vector<1x1xi1> to vector<16x1xi1>
    %153 = arith.andi %149, %152 : vector<16x1xi1>
    %154 = vector.extract_strided_slice %30 {offsets = [3, 0], sizes = [1, 32], strides = [1, 1]} : vector<8x32xf32> to vector<1x32xf32>
    %cst_63 = arith.constant 9.900000e-01 : f32
    %155 = vector.broadcast %cst_63 : f32 to vector<16x32xf32>
    %156 = arith.mulf %155, %145 : vector<16x32xf32>
    %cst_64 = arith.constant 0.00999999977 : f32
    %157 = vector.broadcast %cst_64 : f32 to vector<1x32xf32>
    %158 = arith.mulf %157, %154 : vector<1x32xf32>
    %159 = vector.broadcast %158 : vector<1x32xf32> to vector<16x32xf32>
    %160 = arith.addf %156, %159 : vector<16x32xf32>
    %161 = vector.shape_cast %153 : vector<16x1xi1> to vector<16x1xi1>
    %162 = vector.broadcast %161 : vector<16x1xi1> to vector<16x32xi1>
    %163 = arith.select %162, %160, %145 : vector<16x32xi1>, vector<16x32xf32>
    %164 = vector.extract_strided_slice %70 {offsets = [4, 0], sizes = [1, 1], strides = [1, 1]} : vector<8x1xi32> to vector<1x1xi32>
    %c4 = arith.constant 4 : index
    %c0_65 = arith.constant 0 : index
    %165 = vector.load %arg6[%c4, %c0_65] : memref<8x1xf32, #tpu.memory_space<vmem>>, vector<1x1xf32>
    %166 = vector.broadcast %164 : vector<1x1xi32> to vector<16x1xi32>
    %167 = arith.cmpi eq, %91, %166 : vector<16x1xi32>
    %cst_66 = arith.constant 5.000000e-01 : f32
    %168 = vector.broadcast %cst_66 : f32 to vector<1x1xf32>
    %169 = arith.cmpf ogt, %165, %168 : vector<1x1xf32>
    %170 = vector.broadcast %169 : vector<1x1xi1> to vector<16x1xi1>
    %171 = arith.andi %167, %170 : vector<16x1xi1>
    %172 = vector.extract_strided_slice %30 {offsets = [4, 0], sizes = [1, 32], strides = [1, 1]} : vector<8x32xf32> to vector<1x32xf32>
    %cst_67 = arith.constant 9.900000e-01 : f32
    %173 = vector.broadcast %cst_67 : f32 to vector<16x32xf32>
    %174 = arith.mulf %173, %163 : vector<16x32xf32>
    %cst_68 = arith.constant 0.00999999977 : f32
    %175 = vector.broadcast %cst_68 : f32 to vector<1x32xf32>
    %176 = arith.mulf %175, %172 : vector<1x32xf32>
    %177 = vector.broadcast %176 : vector<1x32xf32> to vector<16x32xf32>
    %178 = arith.addf %174, %177 : vector<16x32xf32>
    %179 = vector.shape_cast %171 : vector<16x1xi1> to vector<16x1xi1>
    %180 = vector.broadcast %179 : vector<16x1xi1> to vector<16x32xi1>
    %181 = arith.select %180, %178, %163 : vector<16x32xi1>, vector<16x32xf32>
    %182 = vector.extract_strided_slice %70 {offsets = [5, 0], sizes = [1, 1], strides = [1, 1]} : vector<8x1xi32> to vector<1x1xi32>
    %c5 = arith.constant 5 : index
    %c0_69 = arith.constant 0 : index
    %183 = vector.load %arg6[%c5, %c0_69] : memref<8x1xf32, #tpu.memory_space<vmem>>, vector<1x1xf32>
    %184 = vector.broadcast %182 : vector<1x1xi32> to vector<16x1xi32>
    %185 = arith.cmpi eq, %91, %184 : vector<16x1xi32>
    %cst_70 = arith.constant 5.000000e-01 : f32
    %186 = vector.broadcast %cst_70 : f32 to vector<1x1xf32>
    %187 = arith.cmpf ogt, %183, %186 : vector<1x1xf32>
    %188 = vector.broadcast %187 : vector<1x1xi1> to vector<16x1xi1>
    %189 = arith.andi %185, %188 : vector<16x1xi1>
    %190 = vector.extract_strided_slice %30 {offsets = [5, 0], sizes = [1, 32], strides = [1, 1]} : vector<8x32xf32> to vector<1x32xf32>
    %cst_71 = arith.constant 9.900000e-01 : f32
    %191 = vector.broadcast %cst_71 : f32 to vector<16x32xf32>
    %192 = arith.mulf %191, %181 : vector<16x32xf32>
    %cst_72 = arith.constant 0.00999999977 : f32
    %193 = vector.broadcast %cst_72 : f32 to vector<1x32xf32>
    %194 = arith.mulf %193, %190 : vector<1x32xf32>
    %195 = vector.broadcast %194 : vector<1x32xf32> to vector<16x32xf32>
    %196 = arith.addf %192, %195 : vector<16x32xf32>
    %197 = vector.shape_cast %189 : vector<16x1xi1> to vector<16x1xi1>
    %198 = vector.broadcast %197 : vector<16x1xi1> to vector<16x32xi1>
    %199 = arith.select %198, %196, %181 : vector<16x32xi1>, vector<16x32xf32>
    %200 = vector.extract_strided_slice %70 {offsets = [6, 0], sizes = [1, 1], strides = [1, 1]} : vector<8x1xi32> to vector<1x1xi32>
    %c6 = arith.constant 6 : index
    %c0_73 = arith.constant 0 : index
    %201 = vector.load %arg6[%c6, %c0_73] : memref<8x1xf32, #tpu.memory_space<vmem>>, vector<1x1xf32>
    %202 = vector.broadcast %200 : vector<1x1xi32> to vector<16x1xi32>
    %203 = arith.cmpi eq, %91, %202 : vector<16x1xi32>
    %cst_74 = arith.constant 5.000000e-01 : f32
    %204 = vector.broadcast %cst_74 : f32 to vector<1x1xf32>
    %205 = arith.cmpf ogt, %201, %204 : vector<1x1xf32>
    %206 = vector.broadcast %205 : vector<1x1xi1> to vector<16x1xi1>
    %207 = arith.andi %203, %206 : vector<16x1xi1>
    %208 = vector.extract_strided_slice %30 {offsets = [6, 0], sizes = [1, 32], strides = [1, 1]} : vector<8x32xf32> to vector<1x32xf32>
    %cst_75 = arith.constant 9.900000e-01 : f32
    %209 = vector.broadcast %cst_75 : f32 to vector<16x32xf32>
    %210 = arith.mulf %209, %199 : vector<16x32xf32>
    %cst_76 = arith.constant 0.00999999977 : f32
    %211 = vector.broadcast %cst_76 : f32 to vector<1x32xf32>
    %212 = arith.mulf %211, %208 : vector<1x32xf32>
    %213 = vector.broadcast %212 : vector<1x32xf32> to vector<16x32xf32>
    %214 = arith.addf %210, %213 : vector<16x32xf32>
    %215 = vector.shape_cast %207 : vector<16x1xi1> to vector<16x1xi1>
    %216 = vector.broadcast %215 : vector<16x1xi1> to vector<16x32xi1>
    %217 = arith.select %216, %214, %199 : vector<16x32xi1>, vector<16x32xf32>
    %218 = vector.extract_strided_slice %70 {offsets = [7, 0], sizes = [1, 1], strides = [1, 1]} : vector<8x1xi32> to vector<1x1xi32>
    %c7 = arith.constant 7 : index
    %c0_77 = arith.constant 0 : index
    %219 = vector.load %arg6[%c7, %c0_77] : memref<8x1xf32, #tpu.memory_space<vmem>>, vector<1x1xf32>
    %220 = vector.broadcast %218 : vector<1x1xi32> to vector<16x1xi32>
    %221 = arith.cmpi eq, %91, %220 : vector<16x1xi32>
    %cst_78 = arith.constant 5.000000e-01 : f32
    %222 = vector.broadcast %cst_78 : f32 to vector<1x1xf32>
    %223 = arith.cmpf ogt, %219, %222 : vector<1x1xf32>
    %224 = vector.broadcast %223 : vector<1x1xi1> to vector<16x1xi1>
    %225 = arith.andi %221, %224 : vector<16x1xi1>
    %226 = vector.extract_strided_slice %30 {offsets = [7, 0], sizes = [1, 32], strides = [1, 1]} : vector<8x32xf32> to vector<1x32xf32>
    %cst_79 = arith.constant 9.900000e-01 : f32
    %227 = vector.broadcast %cst_79 : f32 to vector<16x32xf32>
    %228 = arith.mulf %227, %217 : vector<16x32xf32>
    %cst_80 = arith.constant 0.00999999977 : f32
    %229 = vector.broadcast %cst_80 : f32 to vector<1x32xf32>
    %230 = arith.mulf %229, %226 : vector<1x32xf32>
    %231 = vector.broadcast %230 : vector<1x32xf32> to vector<16x32xf32>
    %232 = arith.addf %228, %231 : vector<16x32xf32>
    %233 = vector.shape_cast %225 : vector<16x1xi1> to vector<16x1xi1>
    %234 = vector.broadcast %233 : vector<16x1xi1> to vector<16x32xi1>
    %235 = arith.select %234, %232, %217 : vector<16x32xi1>, vector<16x32xf32>
    %236 = arith.mulf %235, %235 : vector<16x32xf32>
    %cst_81 = arith.constant dense<0.000000e+00> : vector<16xf32>
    %237 = vector.multi_reduction <add>, %236, %cst_81 [1] : vector<16x32xf32> to vector<16xf32>
    %238 = vector.shape_cast %237 : vector<16xf32> to vector<16x1xf32>
    %cst_82 = arith.constant 1.000000e-24 : f32
    %239 = vector.broadcast %cst_82 : f32 to vector<16x1xf32>
    %240 = arith.maximumf %238, %239 : vector<16x1xf32>
    %241 = math.rsqrt %240 : vector<16x1xf32>
    %242 = vector.broadcast %241 : vector<16x1xf32> to vector<16x32xf32>
    %243 = arith.mulf %235, %242 : vector<16x32xf32>
    %c0_83 = arith.constant 0 : index
    %c0_84 = arith.constant 0 : index
    %244 = vector.load %arg9[%c0_83, %c0_84] : memref<16x32xf32, #tpu.memory_space<vmem>>, vector<16x32xf32>
    tpu.vector_store %arg9[%c0_83, %c0_84], %243 {strides = array<i32>} : memref<16x32xf32, #tpu.memory_space<vmem>>, vector<16x32xf32>,
    %245 = arith.sitofp %70 : vector<8x1xi32> to vector<8x1xf32>
    %cst_85 = arith.constant 0.000000e+00 : f32
    %246 = vector.broadcast %cst_85 : f32 to vector<8x30xf32>
    %247 = tpu.concatenate %21, %30, %54, %81, %90, %245, %246 in 1 : vector<8x16xf32>, vector<8x32xf32>, vector<8x32xf32>, vector<8x16xf32>, vector<8x1xf32>, vector<8x1xf32>, vector<8x30xf32> -> vector<8x128xf32>
    %c0_86 = arith.constant 0 : index
    %c0_87 = arith.constant 0 : index
    %248 = vector.load %arg8[%c0_86, %c0_87] : memref<8x128xf32, #tpu.memory_space<vmem>>, vector<8x128xf32>
    tpu.vector_store %arg8[%c0_86, %c0_87], %247 {strides = array<i32>} : memref<8x128xf32, #tpu.memory_space<vmem>>, vector<8x128xf32>,
    return
  }
}

</mosaic_0001>

<llo_original>
// kernel: pico_plus_forward.1
$region0: #{pico_plus_forward.1}
  #allocation0 [shape = 'u32[]', space=smem, size = 0x4, offset = 0x4, fixed_abs, tag = 'smem constant byte address 0x4 - core index']
  #allocation1 [shape = 'u32[144,128]{1,0:T(1,128)}', space=vmem, size = 0x12000, scoped, tag = 'internal scratch']
  %s0 = inlined_call_operand.vmem [shape: f32[8,768], index: 0, kind: input, shape index: {}]
  %s1 = inlined_call_operand.vmem [shape: f32[8,768], index: 1, kind: input, shape index: {}]
  %s2 = inlined_call_operand.vmem [shape: f32[848,64], index: 2, kind: input, shape index: {}]
  %s3 = inlined_call_operand.vmem [shape: f32[848,64], index: 3, kind: input, shape index: {}, may-alias: {3,10}]
  %s4 = inlined_call_operand.vmem [shape: f32[8,16], index: 4, kind: input, shape index: {}]
  %s5 = inlined_call_operand.vmem [shape: f32[16,32], index: 5, kind: input, shape index: {}, may-alias: {5,9}]
  %s6 = inlined_call_operand.vmem [shape: f32[8,1], index: 6, kind: input, shape index: {}]
  %s7 = inlined_call_operand.vmem [shape: f32[8,8], index: 7, kind: input, shape index: {}]
  %s8 = inlined_call_operand.vmem [shape: f32[8,128], index: 8, kind: output, shape index: {0}]
  %s9 = inlined_call_operand.vmem [shape: f32[16,32], index: 9, kind: output, shape index: {1}, may-alias: {5,9}]
  %s10 = inlined_call_operand.vmem [shape: f32[848,64], index: 10, kind: output, shape index: {2}, may-alias: {3,10}]
  %11 = xla_tuple %s8, %s9, %s10
  %s12 = sld [smem:[#allocation0]]
  $region58: #{pico_plus_forward.1} parent=0
    _
  %s14 = ssub.s32 1, %s12
  %s15 = scalar_select 0, %s14, %s12
  // Predicated region
  $region2: #{pico_plus_forward.1} parent=0 // pred_check
    _
  $region3: #{pico_plus_forward.1} parent=0 // pred_check_branch
    %17 = sbr.rel (0) target = $region5
  $region4: #{pico_plus_forward.1} parent=0 // pred_region
    _
  $region5: #{pico_plus_forward.1} parent=0 // pred_fallthru
    _
  // Predicated region
  $region6: #{pico_plus_forward.1} parent=0 // pred_check
    _
  $region7: #{pico_plus_forward.1} parent=0 // pred_check_branch
    %19 = sbr.rel (0) target = $region9
  $region8: #{pico_plus_forward.1} parent=0 // pred_region
    _
  $region9: #{pico_plus_forward.1} parent=0 // pred_fallthru
    _
  // Predicated region
  $region10: #{pico_plus_forward.1} parent=0 // pred_check
    _
  $region11: #{pico_plus_forward.1} parent=0 // pred_check_branch
    %21 = sbr.rel (0) target = $region13
  $region12: #{pico_plus_forward.1} parent=0 // pred_region
    _
  $region13: #{pico_plus_forward.1} parent=0 // pred_fallthru
    _
  // Predicated region
  $region14: #{pico_plus_forward.1} parent=0 // pred_check
    _
  $region15: #{pico_plus_forward.1} parent=0 // pred_check_branch
    %23 = sbr.rel (0) target = $region17
  $region16: #{pico_plus_forward.1} parent=0 // pred_region
    _
  $region17: #{pico_plus_forward.1} parent=0 // pred_fallthru
    _
  // Predicated region
  $region18: #{pico_plus_forward.1} parent=0 // pred_check
    _
  $region19: #{pico_plus_forward.1} parent=0 // pred_check_branch
    %25 = sbr.rel (0) target = $region21
  $region20: #{pico_plus_forward.1} parent=0 // pred_region
    _
  $region21: #{pico_plus_forward.1} parent=0 // pred_fallthru
    _
  // Predicated region
  $region22: #{pico_plus_forward.1} parent=0 // pred_check
    _
  $region23: #{pico_plus_forward.1} parent=0 // pred_check_branch
    %27 = sbr.rel (0) target = $region25
  $region24: #{pico_plus_forward.1} parent=0 // pred_region
    _
  $region25: #{pico_plus_forward.1} parent=0 // pred_fallthru
    _
  // Predicated region
  $region26: #{pico_plus_forward.1} parent=0 // pred_check
    _
  $region27: #{pico_plus_forward.1} parent=0 // pred_check_branch
    %29 = sbr.rel (0) target = $region29
  $region28: #{pico_plus_forward.1} parent=0 // pred_region
    _
  $region29: #{pico_plus_forward.1} parent=0 // pred_fallthru
    _
  // Predicated region
  $region30: #{pico_plus_forward.1} parent=0 // pred_check
    _
  $region31: #{pico_plus_forward.1} parent=0 // pred_check_branch
    %31 = sbr.rel (0) target = $region33
  $region32: #{pico_plus_forward.1} parent=0 // pred_region
    _
  $region33: #{pico_plus_forward.1} parent=0 // pred_fallthru
    _
  %v32 = vld [vmem:[%s3] sm:$0xff]
  %v33 = vld [vmem:[%s3 + $0x8] sm:$0xff]
  %v34 = vld [vmem:[%s3 + $0x10] sm:$0xff]
  %v35 = vld [vmem:[%s3 + $0x18] sm:$0xff]
  %v36 = vld [vmem:[%s3 + $0x20] sm:$0xff]
  %v37 = vld [vmem:[%s3 + $0x28] sm:$0xff]
  %v38 = vld [vmem:[%s3 + $0x30] sm:$0xff]
  %v39 = vld [vmem:[%s3 + $0x38] sm:$0xff]
  %v40 = vld [vmem:[%s3 + $0x40] sm:$0xff]
  %v41 = vld [vmem:[%s3 + $0x48] sm:$0xff]
  %v42 = vld [vmem:[%s3 + $0x50] sm:$0xff]
  %v43 = vld [vmem:[%s3 + $0x58] sm:$0xff]
  %v44 = vld [vmem:[%s3 + $0x60] sm:$0xff]
  %v45 = vld [vmem:[%s3 + $0x68] sm:$0xff]
  %v46 = vld [vmem:[%s3 + $0x70] sm:$0xff]
  %v47 = vld [vmem:[%s3 + $0x78] sm:$0xff]
  %v48 = vld [vmem:[%s3 + $0x80] sm:$0xff]
  %v49 = vld [vmem:[%s3 + $0x88] sm:$0xff]
  %v50 = vld [vmem:[%s3 + $0x90] sm:$0xff]
  %v51 = vld [vmem:[%s3 + $0x98] sm:$0xff]
  %v52 = vld [vmem:[%s3 + $0xa0] sm:$0xff]
  %v53 = vld [vmem:[%s3 + $0xa8] sm:$0xff]
  %v54 = vld [vmem:[%s3 + $0xb0] sm:$0xff]
  %v55 = vld [vmem:[%s3 + $0xb8] sm:$0xff]
  %v56 = vld [vmem:[%s3 + $0xc0] sm:$0xff]
  %v57 = vld [vmem:[%s3 + $0xc8] sm:$0xff]
  %v58 = vld [vmem:[%s3 + $0xd0] sm:$0xff]
  %v59 = vld [vmem:[%s3 + $0xd8] sm:$0xff]
  %v60 = vld [vmem:[%s3 + $0xe0] sm:$0xff]
  %v61 = vld [vmem:[%s3 + $0xe8] sm:$0xff]
  %v62 = vld [vmem:[%s3 + $0xf0] sm:$0xff]
  %v63 = vld [vmem:[%s3 + $0xf8] sm:$0xff]
  %v64 = vld [vmem:[%s3 + $0x100] sm:$0xff]
  %v65 = vld [vmem:[%s3 + $0x108] sm:$0xff]
  %v66 = vld [vmem:[%s3 + $0x110] sm:$0xff]
  %v67 = vld [vmem:[%s3 + $0x118] sm:$0xff]
  %v68 = vld [vmem:[%s3 + $0x120] sm:$0xff]
  %v69 = vld [vmem:[%s3 + $0x128] sm:$0xff]
  %v70 = vld [vmem:[%s3 + $0x130] sm:$0xff]
  %v71 = vld [vmem:[%s3 + $0x138] sm:$0xff]
  %v72 = vld [vmem:[%s3 + $0x140] sm:$0xff]
  %v73 = vld [vmem:[%s3 + $0x148] sm:$0xff]
  %v74 = vld [vmem:[%s3 + $0x150] sm:$0xff]
  %v75 = vld [vmem:[%s3 + $0x158] sm:$0xff]
  %v76 = vld [vmem:[%s3 + $0x160] sm:$0xff]
  %v77 = vld [vmem:[%s3 + $0x168] sm:$0xff]
  %v78 = vld [vmem:[%s3 + $0x170] sm:$0xff]
  %v79 = vld [vmem:[%s3 + $0x178] sm:$0xff]
  %v80 = vld [vmem:[%s3 + $0x180] sm:$0xff]
  %v81 = vld [vmem:[%s3 + $0x188] sm:$0xff]
  %v82 = vld [vmem:[%s3 + $0x190] sm:$0xff]
  %v83 = vld [vmem:[%s3 + $0x198] sm:$0xff]
  %v84 = vld [vmem:[%s3 + $0x1a0] sm:$0xff]
  %v85 = vld [vmem:[%s3 + $0x1a8] sm:$0xff]
  %v86 = vld [vmem:[%s3 + $0x1b0] sm:$0xff]
  %v87 = vld [vmem:[%s3 + $0x1b8] sm:$0xff]
  %v88 = vld [vmem:[%s3 + $0x1c0] sm:$0xff]
  %v89 = vld [vmem:[%s3 + $0x1c8] sm:$0xff]
  %v90 = vld [vmem:[%s3 + $0x1d0] sm:$0xff]
  %v91 = vld [vmem:[%s3 + $0x1d8] sm:$0xff]
  %v92 = vld [vmem:[%s3 + $0x1e0] sm:$0xff]
  %v93 = vld [vmem:[%s3 + $0x1e8] sm:$0xff]
  %v94 = vld [vmem:[%s3 + $0x1f0] sm:$0xff]
  %v95 = vld [vmem:[%s3 + $0x1f8] sm:$0xff]
  %v96 = vld [vmem:[%s3 + $0x200] sm:$0xff]
  %v97 = vld [vmem:[%s3 + $0x208] sm:$0xff]
  %v98 = vld [vmem:[%s3 + $0x210] sm:$0xff]
  %v99 = vld [vmem:[%s3 + $0x218] sm:$0xff]
  %v100 = vld [vmem:[%s3 + $0x220] sm:$0xff]
  %v101 = vld [vmem:[%s3 + $0x228] sm:$0xff]
  %v102 = vld [vmem:[%s3 + $0x230] sm:$0xff]
  %v103 = vld [vmem:[%s3 + $0x238] sm:$0xff]
  %v104 = vld [vmem:[%s3 + $0x240] sm:$0xff]
  %v105 = vld [vmem:[%s3 + $0x248] sm:$0xff]
  %v106 = vld [vmem:[%s3 + $0x250] sm:$0xff]
  %v107 = vld [vmem:[%s3 + $0x258] sm:$0xff]
  %v108 = vld [vmem:[%s3 + $0x260] sm:$0xff]
  %v109 = vld [vmem:[%s3 + $0x268] sm:$0xff]
  %v110 = vld [vmem:[%s3 + $0x270] sm:$0xff]
  %v111 = vld [vmem:[%s3 + $0x278] sm:$0xff]
  %v112 = vld [vmem:[%s3 + $0x280] sm:$0xff]
  %v113 = vld [vmem:[%s3 + $0x288] sm:$0xff]
  %v114 = vld [vmem:[%s3 + $0x290] sm:$0xff]
  %v115 = vld [vmem:[%s3 + $0x298] sm:$0xff]
  %v116 = vld [vmem:[%s3 + $0x2a0] sm:$0xff]
  %v117 = vld [vmem:[%s3 + $0x2a8] sm:$0xff]
  %v118 = vld [vmem:[%s3 + $0x2b0] sm:$0xff]
  %v119 = vld [vmem:[%s3 + $0x2b8] sm:$0xff]
  %v120 = vld [vmem:[%s3 + $0x2c0] sm:$0xff]
  %v121 = vld [vmem:[%s3 + $0x2c8] sm:$0xff]
  %v122 = vld [vmem:[%s3 + $0x2d0] sm:$0xff]
  %v123 = vld [vmem:[%s3 + $0x2d8] sm:$0xff]
  %v124 = vld [vmem:[%s3 + $0x2e0] sm:$0xff]
  %v125 = vld [vmem:[%s3 + $0x2e8] sm:$0xff]
  %v126 = vld [vmem:[%s3 + $0x2f0] sm:$0xff]
  %v127 = vld [vmem:[%s3 + $0x2f8] sm:$0xff]
  %v128 = vld [vmem:[%s3 + $0x300] sm:$0xff]
  %v129 = vld [vmem:[%s3 + $0x308] sm:$0xff]
  %v130 = vld [vmem:[%s3 + $0x310] sm:$0xff]
  %v131 = vld [vmem:[%s3 + $0x318] sm:$0xff]
  %v132 = vld [vmem:[%s3 + $0x320] sm:$0xff]
  %v133 = vld [vmem:[%s3 + $0x328] sm:$0xff]
  %v134 = vld [vmem:[%s3 + $0x330] sm:$0xff]
  %v135 = vld [vmem:[%s3 + $0x338] sm:$0xff]
  %v136 = vld [vmem:[%s3 + $0x340] sm:$0xff]
  %v137 = vld [vmem:[%s3 + $0x348] sm:$0xff]
  %v138 = vmul.f32 %v32, 0.999
  %v139 = vmul.f32 %v33, 0.999
  %v140 = vmul.f32 %v34, 0.999
  %v141 = vmul.f32 %v35, 0.999
  %v142 = vmul.f32 %v36, 0.999
  %v143 = vmul.f32 %v37, 0.999
  %v144 = vmul.f32 %v38, 0.999
  %v145 = vmul.f32 %v39, 0.999
  %v146 = vmul.f32 %v40, 0.999
  %v147 = vmul.f32 %v41, 0.999
  %v148 = vmul.f32 %v42, 0.999
  %v149 = vmul.f32 %v43, 0.999
  %v150 = vmul.f32 %v44, 0.999
  %v151 = vmul.f32 %v45, 0.999
  %v152 = vmul.f32 %v46, 0.999
  %v153 = vmul.f32 %v47, 0.999
  %v154 = vmul.f32 %v48, 0.999
  %v155 = vmul.f32 %v49, 0.999
  %v156 = vmul.f32 %v50, 0.999
  %v157 = vmul.f32 %v51, 0.999
  %v158 = vmul.f32 %v52, 0.999
  %v159 = vmul.f32 %v53, 0.999
  %v160 = vmul.f32 %v54, 0.999
  %v161 = vmul.f32 %v55, 0.999
  %v162 = vmul.f32 %v56, 0.999
  %v163 = vmul.f32 %v57, 0.999
  %v164 = vmul.f32 %v58, 0.999
  %v165 = vmul.f32 %v59, 0.999
  %v166 = vmul.f32 %v60, 0.999
  %v167 = vmul.f32 %v61, 0.999
  %v168 = vmul.f32 %v62, 0.999
  %v169 = vmul.f32 %v63, 0.999
  %v170 = vmul.f32 %v64, 0.999
  %v171 = vmul.f32 %v65, 0.999
  %v172 = vmul.f32 %v66, 0.999
  %v173 = vmul.f32 %v67, 0.999
  %v174 = vmul.f32 %v68, 0.999
  %v175 = vmul.f32 %v69, 0.999
  %v176 = vmul.f32 %v70, 0.999
  %v177 = vmul.f32 %v71, 0.999
  %v178 = vmul.f32 %v72, 0.999
  %v179 = vmul.f32 %v73, 0.999
  %v180 = vmul.f32 %v74, 0.999
  %v181 = vmul.f32 %v75, 0.999
  %v182 = vmul.f32 %v76, 0.999
  %v183 = vmul.f32 %v77, 0.999
  %v184 = vmul.f32 %v78, 0.999
  %v185 = vmul.f32 %v79, 0.999
  %v186 = vmul.f32 %v80, 0.999
  %v187 = vmul.f32 %v81, 0.999
  %v188 = vmul.f32 %v82, 0.999
  %v189 = vmul.f32 %v83, 0.999
  %v190 = vmul.f32 %v84, 0.999
  %v191 = vmul.f32 %v85, 0.999
  %v192 = vmul.f32 %v86, 0.999
  %v193 = vmul.f32 %v87, 0.999
  %v194 = vmul.f32 %v88, 0.999
  %v195 = vmul.f32 %v89, 0.999
  %v196 = vmul.f32 %v90, 0.999
  %v197 = vmul.f32 %v91, 0.999
  %v198 = vmul.f32 %v92, 0.999
  %v199 = vmul.f32 %v93, 0.999
  %v200 = vmul.f32 %v94, 0.999
  %v201 = vmul.f32 %v95, 0.999
  %v202 = vmul.f32 %v96, 0.999
  %v203 = vmul.f32 %v97, 0.999
  %v204 = vmul.f32 %v98, 0.999
  %v205 = vmul.f32 %v99, 0.999
  %v206 = vmul.f32 %v100, 0.999
  %v207 = vmul.f32 %v101, 0.999
  %v208 = vmul.f32 %v102, 0.999
  %v209 = vmul.f32 %v103, 0.999
  %v210 = vmul.f32 %v104, 0.999
  %v211 = vmul.f32 %v105, 0.999
  %v212 = vmul.f32 %v106, 0.999
  %v213 = vmul.f32 %v107, 0.999
  %v214 = vmul.f32 %v108, 0.999
  %v215 = vmul.f32 %v109, 0.999
  %v216 = vmul.f32 %v110, 0.999
  %v217 = vmul.f32 %v111, 0.999
  %v218 = vmul.f32 %v112, 0.999
  %v219 = vmul.f32 %v113, 0.999
  %v220 = vmul.f32 %v114, 0.999
  %v221 = vmul.f32 %v115, 0.999
  %v222 = vmul.f32 %v116, 0.999
  %v223 = vmul.f32 %v117, 0.999
  %v224 = vmul.f32 %v118, 0.999
  %v225 = vmul.f32 %v119, 0.999
  %v226 = vmul.f32 %v120, 0.999
  %v227 = vmul.f32 %v121, 0.999
  %v228 = vmul.f32 %v122, 0.999
  %v229 = vmul.f32 %v123, 0.999
  %v230 = vmul.f32 %v124, 0.999
  %v231 = vmul.f32 %v125, 0.999
  %v232 = vmul.f32 %v126, 0.999
  %v233 = vmul.f32 %v127, 0.999
  %v234 = vmul.f32 %v128, 0.999
  %v235 = vmul.f32 %v129, 0.999
  %v236 = vmul.f32 %v130, 0.999
  %v237 = vmul.f32 %v131, 0.999
  %v238 = vmul.f32 %v132, 0.999
  %v239 = vmul.f32 %v133, 0.999
  %v240 = vmul.f32 %v134, 0.999
  %v241 = vmul.f32 %v135, 0.999
  %v242 = vmul.f32 %v136, 0.999
  %v243 = vmul.f32 %v137, 0.999
  %v244 = vld [vmem:[%s2] sm:$0xff]
  %v245 = vld [vmem:[%s2 + $0x8] sm:$0xff]
  %v246 = vld [vmem:[%s2 + $0x10] sm:$0xff]
  %v247 = vld [vmem:[%s2 + $0x18] sm:$0xff]
  %v248 = vld [vmem:[%s2 + $0x20] sm:$0xff]
  %v249 = vld [vmem:[%s2 + $0x28] sm:$0xff]
  %v250 = vld [vmem:[%s2 + $0x30] sm:$0xff]
  %v251 = vld [vmem:[%s2 + $0x38] sm:$0xff]
  %v252 = vld [vmem:[%s2 + $0x40] sm:$0xff]
  %v253 = vld [vmem:[%s2 + $0x48] sm:$0xff]
  %v254 = vld [vmem:[%s2 + $0x50] sm:$0xff]
  %v255 = vld [vmem:[%s2 + $0x58] sm:$0xff]
  %v256 = vld [vmem:[%s2 + $0x60] sm:$0xff]
  %v257 = vld [vmem:[%s2 + $0x68] sm:$0xff]
  %v258 = vld [vmem:[%s2 + $0x70] sm:$0xff]
  %v259 = vld [vmem:[%s2 + $0x78] sm:$0xff]
  %v260 = vld [vmem:[%s2 + $0x80] sm:$0xff]
  %v261 = vld [vmem:[%s2 + $0x88] sm:$0xff]
  %v262 = vld [vmem:[%s2 + $0x90] sm:$0xff]
  %v263 = vld [vmem:[%s2 + $0x98] sm:$0xff]
  %v264 = vld [vmem:[%s2 + $0xa0] sm:$0xff]
  %v265 = vld [vmem:[%s2 + $0xa8] sm:$0xff]
  %v266 = vld [vmem:[%s2 + $0xb0] sm:$0xff]
  %v267 = vld [vmem:[%s2 + $0xb8] sm:$0xff]
  %v268 = vld [vmem:[%s2 + $0xc0] sm:$0xff]
  %v269 = vld [vmem:[%s2 + $0xc8] sm:$0xff]
  %v270 = vld [vmem:[%s2 + $0xd0] sm:$0xff]
  %v271 = vld [vmem:[%s2 + $0xd8] sm:$0xff]
  %v272 = vld [vmem:[%s2 + $0xe0] sm:$0xff]
  %v273 = vld [vmem:[%s2 + $0xe8] sm:$0xff]
  %v274 = vld [vmem:[%s2 + $0xf0] sm:$0xff]
  %v275 = vld [vmem:[%s2 + $0xf8] sm:$0xff]
  %v276 = vld [vmem:[%s2 + $0x100] sm:$0xff]
  %v277 = vld [vmem:[%s2 + $0x108] sm:$0xff]
  %v278 = vld [vmem:[%s2 + $0x110] sm:$0xff]
  %v279 = vld [vmem:[%s2 + $0x118] sm:$0xff]
  %v280 = vld [vmem:[%s2 + $0x120] sm:$0xff]
  %v281 = vld [vmem:[%s2 + $0x128] sm:$0xff]
  %v282 = vld [vmem:[%s2 + $0x130] sm:$0xff]
  %v283 = vld [vmem:[%s2 + $0x138] sm:$0xff]
  %v284 = vld [vmem:[%s2 + $0x140] sm:$0xff]
  %v285 = vld [vmem:[%s2 + $0x148] sm:$0xff]
  %v286 = vld [vmem:[%s2 + $0x150] sm:$0xff]
  %v287 = vld [vmem:[%s2 + $0x158] sm:$0xff]
  %v288 = vld [vmem:[%s2 + $0x160] sm:$0xff]
  %v289 = vld [vmem:[%s2 + $0x168] sm:$0xff]
  %v290 = vld [vmem:[%s2 + $0x170] sm:$0xff]
  %v291 = vld [vmem:[%s2 + $0x178] sm:$0xff]
  %v292 = vld [vmem:[%s2 + $0x180] sm:$0xff]
  %v293 = vld [vmem:[%s2 + $0x188] sm:$0xff]
  %v294 = vld [vmem:[%s2 + $0x190] sm:$0xff]
  %v295 = vld [vmem:[%s2 + $0x198] sm:$0xff]
  %v296 = vld [vmem:[%s2 + $0x1a0] sm:$0xff]
  %v297 = vld [vmem:[%s2 + $0x1a8] sm:$0xff]
  %v298 = vld [vmem:[%s2 + $0x1b0] sm:$0xff]
  %v299 = vld [vmem:[%s2 + $0x1b8] sm:$0xff]
  %v300 = vld [vmem:[%s2 + $0x1c0] sm:$0xff]
  %v301 = vld [vmem:[%s2 + $0x1c8] sm:$0xff]
  %v302 = vld [vmem:[%s2 + $0x1d0] sm:$0xff]
  %v303 = vld [vmem:[%s2 + $0x1d8] sm:$0xff]
  %v304 = vld [vmem:[%s2 + $0x1e0] sm:$0xff]
  %v305 = vld [vmem:[%s2 + $0x1e8] sm:$0xff]
  %v306 = vld [vmem:[%s2 + $0x1f0] sm:$0xff]
  %v307 = vld [vmem:[%s2 + $0x1f8] sm:$0xff]
  %v308 = vld [vmem:[%s2 + $0x200] sm:$0xff]
  %v309 = vld [vmem:[%s2 + $0x208] sm:$0xff]
  %v310 = vld [vmem:[%s2 + $0x210] sm:$0xff]
  %v311 = vld [vmem:[%s2 + $0x218] sm:$0xff]
  %v312 = vld [vmem:[%s2 + $0x220] sm:$0xff]
  %v313 = vld [vmem:[%s2 + $0x228] sm:$0xff]
  %v314 = vld [vmem:[%s2 + $0x230] sm:$0xff]
  %v315 = vld [vmem:[%s2 + $0x238] sm:$0xff]
  %v316 = vld [vmem:[%s2 + $0x240] sm:$0xff]
  %v317 = vld [vmem:[%s2 + $0x248] sm:$0xff]
  %v318 = vld [vmem:[%s2 + $0x250] sm:$0xff]
  %v319 = vld [vmem:[%s2 + $0x258] sm:$0xff]
  %v320 = vld [vmem:[%s2 + $0x260] sm:$0xff]
  %v321 = vld [vmem:[%s2 + $0x268] sm:$0xff]
  %v322 = vld [vmem:[%s2 + $0x270] sm:$0xff]
  %v323 = vld [vmem:[%s2 + $0x278] sm:$0xff]
  %v324 = vld [vmem:[%s2 + $0x280] sm:$0xff]
  %v325 = vld [vmem:[%s2 + $0x288] sm:$0xff]
  %v326 = vld [vmem:[%s2 + $0x290] sm:$0xff]
  %v327 = vld [vmem:[%s2 + $0x298] sm:$0xff]
  %v328 = vld [vmem:[%s2 + $0x2a0] sm:$0xff]
  %v329 = vld [vmem:[%s2 + $0x2a8] sm:$0xff]
  %v330 = vld [vmem:[%s2 + $0x2b0] sm:$0xff]
  %v331 = vld [vmem:[%s2 + $0x2b8] sm:$0xff]
  %v332 = vld [vmem:[%s2 + $0x2c0] sm:$0xff]
  %v333 = vld [vmem:[%s2 + $0x2c8] sm:$0xff]
  %v334 = vld [vmem:[%s2 + $0x2d0] sm:$0xff]
  %v335 = vld [vmem:[%s2 + $0x2d8] sm:$0xff]
  %v336 = vld [vmem:[%s2 + $0x2e0] sm:$0xff]
  %v337 = vld [vmem:[%s2 + $0x2e8] sm:$0xff]
  %v338 = vld [vmem:[%s2 + $0x2f0] sm:$0xff]
  %v339 = vld [vmem:[%s2 + $0x2f8] sm:$0xff]
  %v340 = vld [vmem:[%s2 + $0x300] sm:$0xff]
  %v341 = vld [vmem:[%s2 + $0x308] sm:$0xff]
  %v342 = vld [vmem:[%s2 + $0x310] sm:$0xff]
  %v343 = vld [vmem:[%s2 + $0x318] sm:$0xff]
  %v344 = vld [vmem:[%s2 + $0x320] sm:$0xff]
  %v345 = vld [vmem:[%s2 + $0x328] sm:$0xff]
  %v346 = vld [vmem:[%s2 + $0x330] sm:$0xff]
  %v347 = vld [vmem:[%s2 + $0x338] sm:$0xff]
  %v348 = vld [vmem:[%s2 + $0x340] sm:$0xff]
  %v349 = vld [vmem:[%s2 + $0x348] sm:$0xff]
  %v350 = vmul.f32 %v244, 0.001
  %v351 = vmul.f32 %v245, 0.001
  %v352 = vmul.f32 %v246, 0.001
  %v353 = vmul.f32 %v247, 0.001
  %v354 = vmul.f32 %v248, 0.001
  %v355 = vmul.f32 %v249, 0.001
  %v356 = vmul.f32 %v250, 0.001
  %v357 = vmul.f32 %v251, 0.001
  %v358 = vmul.f32 %v252, 0.001
  %v359 = vmul.f32 %v253, 0.001
  %v360 = vmul.f32 %v254, 0.001
  %v361 = vmul.f32 %v255, 0.001
  %v362 = vmul.f32 %v256, 0.001
  %v363 = vmul.f32 %v257, 0.001
  %v364 = vmul.f32 %v258, 0.001
  %v365 = vmul.f32 %v259, 0.001
  %v366 = vmul.f32 %v260, 0.001
  %v367 = vmul.f32 %v261, 0.001
  %v368 = vmul.f32 %v262, 0.001
  %v369 = vmul.f32 %v263, 0.001
  %v370 = vmul.f32 %v264, 0.001
  %v371 = vmul.f32 %v265, 0.001
  %v372 = vmul.f32 %v266, 0.001
  %v373 = vmul.f32 %v267, 0.001
  %v374 = vmul.f32 %v268, 0.001
  %v375 = vmul.f32 %v269, 0.001
  %v376 = vmul.f32 %v270, 0.001
  %v377 = vmul.f32 %v271, 0.001
  %v378 = vmul.f32 %v272, 0.001
  %v379 = vmul.f32 %v273, 0.001
  %v380 = vmul.f32 %v274, 0.001
  %v381 = vmul.f32 %v275, 0.001
  %v382 = vmul.f32 %v276, 0.001
  %v383 = vmul.f32 %v277, 0.001
  %v384 = vmul.f32 %v278, 0.001
  %v385 = vmul.f32 %v279, 0.001
  %v386 = vmul.f32 %v280, 0.001
  %v387 = vmul.f32 %v281, 0.001
  %v388 = vmul.f32 %v282, 0.001
  %v389 = vmul.f32 %v283, 0.001
  %v390 = vmul.f32 %v284, 0.001
  %v391 = vmul.f32 %v285, 0.001
  %v392 = vmul.f32 %v286, 0.001
  %v393 = vmul.f32 %v287, 0.001
  %v394 = vmul.f32 %v288, 0.001
  %v395 = vmul.f32 %v289, 0.001
  %v396 = vmul.f32 %v290, 0.001
  %v397 = vmul.f32 %v291, 0.001
  %v398 = vmul.f32 %v292, 0.001
  %v399 = vmul.f32 %v293, 0.001
  %v400 = vmul.f32 %v294, 0.001
  %v401 = vmul.f32 %v295, 0.001
  %v402 = vmul.f32 %v296, 0.001
  %v403 = vmul.f32 %v297, 0.001
  %v404 = vmul.f32 %v298, 0.001
  %v405 = vmul.f32 %v299, 0.001
  %v406 = vmul.f32 %v300, 0.001
  %v407 = vmul.f32 %v301, 0.001
  %v408 = vmul.f32 %v302, 0.001
  %v409 = vmul.f32 %v303, 0.001
  %v410 = vmul.f32 %v304, 0.001
  %v411 = vmul.f32 %v305, 0.001
  %v412 = vmul.f32 %v306, 0.001
  %v413 = vmul.f32 %v307, 0.001
  %v414 = vmul.f32 %v308, 0.001
  %v415 = vmul.f32 %v309, 0.001
  %v416 = vmul.f32 %v310, 0.001
  %v417 = vmul.f32 %v311, 0.001
  %v418 = vmul.f32 %v312, 0.001
  %v419 = vmul.f32 %v313, 0.001
  %v420 = vmul.f32 %v314, 0.001
  %v421 = vmul.f32 %v315, 0.001
  %v422 = vmul.f32 %v316, 0.001
  %v423 = vmul.f32 %v317, 0.001
  %v424 = vmul.f32 %v318, 0.001
  %v425 = vmul.f32 %v319, 0.001
  %v426 = vmul.f32 %v320, 0.001
  %v427 = vmul.f32 %v321, 0.001
  %v428 = vmul.f32 %v322, 0.001
  %v429 = vmul.f32 %v323, 0.001
  %v430 = vmul.f32 %v324, 0.001
  %v431 = vmul.f32 %v325, 0.001
  %v432 = vmul.f32 %v326, 0.001
  %v433 = vmul.f32 %v327, 0.001
  %v434 = vmul.f32 %v328, 0.001
  %v435 = vmul.f32 %v329, 0.001
  %v436 = vmul.f32 %v330, 0.001
  %v437 = vmul.f32 %v331, 0.001
  %v438 = vmul.f32 %v332, 0.001
  %v439 = vmul.f32 %v333, 0.001
  %v440 = vmul.f32 %v334, 0.001
  %v441 = vmul.f32 %v335, 0.001
  %v442 = vmul.f32 %v336, 0.001
  %v443 = vmul.f32 %v337, 0.001
  %v444 = vmul.f32 %v338, 0.001
  %v445 = vmul.f32 %v339, 0.001
  %v446 = vmul.f32 %v340, 0.001
  %v447 = vmul.f32 %v341, 0.001
  %v448 = vmul.f32 %v342, 0.001
  %v449 = vmul.f32 %v343, 0.001
  %v450 = vmul.f32 %v344, 0.001
  %v451 = vmul.f32 %v345, 0.001
  %v452 = vmul.f32 %v346, 0.001
  %v453 = vmul.f32 %v347, 0.001
  %v454 = vmul.f32 %v348, 0.001
  %v455 = vmul.f32 %v349, 0.001
  %v456 = vadd.f32 %v138, %v350
  %v457 = vadd.f32 %v139, %v351
  %v458 = vadd.f32 %v140, %v352
  %v459 = vadd.f32 %v141, %v353
  %v460 = vadd.f32 %v142, %v354
  %v461 = vadd.f32 %v143, %v355
  %v462 = vadd.f32 %v144, %v356
  %v463 = vadd.f32 %v145, %v357
  %v464 = vadd.f32 %v146, %v358
  %v465 = vadd.f32 %v147, %v359
  %v466 = vadd.f32 %v148, %v360
  %v467 = vadd.f32 %v149, %v361
  %v468 = vadd.f32 %v150, %v362
  %v469 = vadd.f32 %v151, %v363
  %v470 = vadd.f32 %v152, %v364
  %v471 = vadd.f32 %v153, %v365
  %v472 = vadd.f32 %v154, %v366
  %v473 = vadd.f32 %v155, %v367
  %v474 = vadd.f32 %v156, %v368
  %v475 = vadd.f32 %v157, %v369
  %v476 = vadd.f32 %v158, %v370
  %v477 = vadd.f32 %v159, %v371
  %v478 = vadd.f32 %v160, %v372
  %v479 = vadd.f32 %v161, %v373
  %v480 = vadd.f32 %v162, %v374
  %v481 = vadd.f32 %v163, %v375
  %v482 = vadd.f32 %v164, %v376
  %v483 = vadd.f32 %v165, %v377
  %v484 = vadd.f32 %v166, %v378
  %v485 = vadd.f32 %v167, %v379
  %v486 = vadd.f32 %v168, %v380
  %v487 = vadd.f32 %v169, %v381
  %v488 = vadd.f32 %v170, %v382
  %v489 = vadd.f32 %v171, %v383
  %v490 = vadd.f32 %v172, %v384
  %v491 = vadd.f32 %v173, %v385
  %v492 = vadd.f32 %v174, %v386
  %v493 = vadd.f32 %v175, %v387
  %v494 = vadd.f32 %v176, %v388
  %v495 = vadd.f32 %v177, %v389
  %v496 = vadd.f32 %v178, %v390
  %v497 = vadd.f32 %v179, %v391
  %v498 = vadd.f32 %v180, %v392
  %v499 = vadd.f32 %v181, %v393
  %v500 = vadd.f32 %v182, %v394
  %v501 = vadd.f32 %v183, %v395
  %v502 = vadd.f32 %v184, %v396
  %v503 = vadd.f32 %v185, %v397
  %v504 = vadd.f32 %v186, %v398
  %v505 = vadd.f32 %v187, %v399
  %v506 = vadd.f32 %v188, %v400
  %v507 = vadd.f32 %v189, %v401
  %v508 = vadd.f32 %v190, %v402
  %v509 = vadd.f32 %v191, %v403
  %v510 = vadd.f32 %v192, %v404
  %v511 = vadd.f32 %v193, %v405
  %v512 = vadd.f32 %v194, %v406
  %v513 = vadd.f32 %v195, %v407
  %v514 = vadd.f32 %v196, %v408
  %v515 = vadd.f32 %v197, %v409
  %v516 = vadd.f32 %v198, %v410
  %v517 = vadd.f32 %v199, %v411
  %v518 = vadd.f32 %v200, %v412
  %v519 = vadd.f32 %v201, %v413
  %v520 = vadd.f32 %v202, %v414
  %v521 = vadd.f32 %v203, %v415
  %v522 = vadd.f32 %v204, %v416
  %v523 = vadd.f32 %v205, %v417
  %v524 = vadd.f32 %v206, %v418
  %v525 = vadd.f32 %v207, %v419
  %v526 = vadd.f32 %v208, %v420
  %v527 = vadd.f32 %v209, %v421
  %v528 = vadd.f32 %v210, %v422
  %v529 = vadd.f32 %v211, %v423
  %v530 = vadd.f32 %v212, %v424
  %v531 = vadd.f32 %v213, %v425
  %v532 = vadd.f32 %v214, %v426
  %v533 = vadd.f32 %v215, %v427
  %v534 = vadd.f32 %v216, %v428
  %v535 = vadd.f32 %v217, %v429
  %v536 = vadd.f32 %v218, %v430
  %v537 = vadd.f32 %v219, %v431
  %v538 = vadd.f32 %v220, %v432
  %v539 = vadd.f32 %v221, %v433
  %v540 = vadd.f32 %v222, %v434
  %v541 = vadd.f32 %v223, %v435
  %v542 = vadd.f32 %v224, %v436
  %v543 = vadd.f32 %v225, %v437
  %v544 = vadd.f32 %v226, %v438
  %v545 = vadd.f32 %v227, %v439
  %v546 = vadd.f32 %v228, %v440
  %v547 = vadd.f32 %v229, %v441
  %v548 = vadd.f32 %v230, %v442
  %v549 = vadd.f32 %v231, %v443
  %v550 = vadd.f32 %v232, %v444
  %v551 = vadd.f32 %v233, %v445
  %v552 = vadd.f32 %v234, %v446
  %v553 = vadd.f32 %v235, %v447
  %v554 = vadd.f32 %v236, %v448
  %v555 = vadd.f32 %v237, %v449
  %v556 = vadd.f32 %v238, %v450
  %v557 = vadd.f32 %v239, %v451
  %v558 = vadd.f32 %v240, %v452
  %v559 = vadd.f32 %v241, %v453
  %v560 = vadd.f32 %v242, %v454
  %v561 = vadd.f32 %v243, %v455
  %vm562 = vcmask 523264
  %563 = vst.msk [vmem:[%s10] sm:$0xff] %vm562, %v456
  %564 = vst.msk [vmem:[%s10 + $0x8] sm:$0xff] %vm562, %v457
  %565 = vst.msk [vmem:[%s10 + $0x10] sm:$0xff] %vm562, %v458
  %566 = vst.msk [vmem:[%s10 + $0x18] sm:$0xff] %vm562, %v459
  %567 = vst.msk [vmem:[%s10 + $0x20] sm:$0xff] %vm562, %v460
  %568 = vst.msk [vmem:[%s10 + $0x28] sm:$0xff] %vm562, %v461
  %569 = vst.msk [vmem:[%s10 + $0x30] sm:$0xff] %vm562, %v462
  %570 = vst.msk [vmem:[%s10 + $0x38] sm:$0xff] %vm562, %v463
  %571 = vst.msk [vmem:[%s10 + $0x40] sm:$0xff] %vm562, %v464
  %572 = vst.msk [vmem:[%s10 + $0x48] sm:$0xff] %vm562, %v465
  %573 = vst.msk [vmem:[%s10 + $0x50] sm:$0xff] %vm562, %v466
  %574 = vst.msk [vmem:[%s10 + $0x58] sm:$0xff] %vm562, %v467
  %575 = vst.msk [vmem:[%s10 + $0x60] sm:$0xff] %vm562, %v468
  %576 = vst.msk [vmem:[%s10 + $0x68] sm:$0xff] %vm562, %v469
  %577 = vst.msk [vmem:[%s10 + $0x70] sm:$0xff] %vm562, %v470
  %578 = vst.msk [vmem:[%s10 + $0x78] sm:$0xff] %vm562, %v471
  %579 = vst.msk [vmem:[%s10 + $0x80] sm:$0xff] %vm562, %v472
  %580 = vst.msk [vmem:[%s10 + $0x88] sm:$0xff] %vm562, %v473
  %581 = vst.msk [vmem:[%s10 + $0x90] sm:$0xff] %vm562, %v474
  %582 = vst.msk [vmem:[%s10 + $0x98] sm:$0xff] %vm562, %v475
  %583 = vst.msk [vmem:[%s10 + $0xa0] sm:$0xff] %vm562, %v476
  %584 = vst.msk [vmem:[%s10 + $0xa8] sm:$0xff] %vm562, %v477
  %585 = vst.msk [vmem:[%s10 + $0xb0] sm:$0xff] %vm562, %v478
  %586 = vst.msk [vmem:[%s10 + $0xb8] sm:$0xff] %vm562, %v479
  %587 = vst.msk [vmem:[%s10 + $0xc0] sm:$0xff] %vm562, %v480
  %588 = vst.msk [vmem:[%s10 + $0xc8] sm:$0xff] %vm562, %v481
  %589 = vst.msk [vmem:[%s10 + $0xd0] sm:$0xff] %vm562, %v482
  %590 = vst.msk [vmem:[%s10 + $0xd8] sm:$0xff] %vm562, %v483
  %591 = vst.msk [vmem:[%s10 + $0xe0] sm:$0xff] %vm562, %v484
  %592 = vst.msk [vmem:[%s10 + $0xe8] sm:$0xff] %vm562, %v485
  %593 = vst.msk [vmem:[%s10 + $0xf0] sm:$0xff] %vm562, %v486
  %594 = vst.msk [vmem:[%s10 + $0xf8] sm:$0xff] %vm562, %v487
  %595 = vst.msk [vmem:[%s10 + $0x100] sm:$0xff] %vm562, %v488
  %596 = vst.msk [vmem:[%s10 + $0x108] sm:$0xff] %vm562, %v489
  %597 = vst.msk [vmem:[%s10 + $0x110] sm:$0xff] %vm562, %v490
  %598 = vst.msk [vmem:[%s10 + $0x118] sm:$0xff] %vm562, %v491
  %599 = vst.msk [vmem:[%s10 + $0x120] sm:$0xff] %vm562, %v492
  %600 = vst.msk [vmem:[%s10 + $0x128] sm:$0xff] %vm562, %v493
  %601 = vst.msk [vmem:[%s10 + $0x130] sm:$0xff] %vm562, %v494
  %602 = vst.msk [vmem:[%s10 + $0x138] sm:$0xff] %vm562, %v495
  %603 = vst.msk [vmem:[%s10 + $0x140] sm:$0xff] %vm562, %v496
  %604 = vst.msk [vmem:[%s10 + $0x148] sm:$0xff] %vm562, %v497
  %605 = vst.msk [vmem:[%s10 + $0x150] sm:$0xff] %vm562, %v498
  %606 = vst.msk [vmem:[%s10 + $0x158] sm:$0xff] %vm562, %v499
  %607 = vst.msk [vmem:[%s10 + $0x160] sm:$0xff] %vm562, %v500
  %608 = vst.msk [vmem:[%s10 + $0x168] sm:$0xff] %vm562, %v501
  %609 = vst.msk [vmem:[%s10 + $0x170] sm:$0xff] %vm562, %v502
  %610 = vst.msk [vmem:[%s10 + $0x178] sm:$0xff] %vm562, %v503
  %611 = vst.msk [vmem:[%s10 + $0x180] sm:$0xff] %vm562, %v504
  %612 = vst.msk [vmem:[%s10 + $0x188] sm:$0xff] %vm562, %v505
  %613 = vst.msk [vmem:[%s10 + $0x190] sm:$0xff] %vm562, %v506
  %614 = vst.msk [vmem:[%s10 + $0x198] sm:$0xff] %vm562, %v507
  %615 = vst.msk [vmem:[%s10 + $0x1a0] sm:$0xff] %vm562, %v508
  %616 = vst.msk [vmem:[%s10 + $0x1a8] sm:$0xff] %vm562, %v509
  %617 = vst.msk [vmem:[%s10 + $0x1b0] sm:$0xff] %vm562, %v510
  %618 = vst.msk [vmem:[%s10 + $0x1b8] sm:$0xff] %vm562, %v511
  %619 = vst.msk [vmem:[%s10 + $0x1c0] sm:$0xff] %vm562, %v512
  %620 = vst.msk [vmem:[%s10 + $0x1c8] sm:$0xff] %vm562, %v513
  %621 = vst.msk [vmem:[%s10 + $0x1d0] sm:$0xff] %vm562, %v514
  %622 = vst.msk [vmem:[%s10 + $0x1d8] sm:$0xff] %vm562, %v515
  %623 = vst.msk [vmem:[%s10 + $0x1e0] sm:$0xff] %vm562, %v516
  %624 = vst.msk [vmem:[%s10 + $0x1e8] sm:$0xff] %vm562, %v517
  %625 = vst.msk [vmem:[%s10 + $0x1f0] sm:$0xff] %vm562, %v518
  %626 = vst.msk [vmem:[%s10 + $0x1f8] sm:$0xff] %vm562, %v519
  %627 = vst.msk [vmem:[%s10 + $0x200] sm:$0xff] %vm562, %v520
  %628 = vst.msk [vmem:[%s10 + $0x208] sm:$0xff] %vm562, %v521
  %629 = vst.msk [vmem:[%s10 + $0x210] sm:$0xff] %vm562, %v522
  %630 = vst.msk [vmem:[%s10 + $0x218] sm:$0xff] %vm562, %v523
  %631 = vst.msk [vmem:[%s10 + $0x220] sm:$0xff] %vm562, %v524
  %632 = vst.msk [vmem:[%s10 + $0x228] sm:$0xff] %vm562, %v525
  %633 = vst.msk [vmem:[%s10 + $0x230] sm:$0xff] %vm562, %v526
  %634 = vst.msk [vmem:[%s10 + $0x238] sm:$0xff] %vm562, %v527
  %635 = vst.msk [vmem:[%s10 + $0x240] sm:$0xff] %vm562, %v528
  %636 = vst.msk [vmem:[%s10 + $0x248] sm:$0xff] %vm562, %v529
  %637 = vst.msk [vmem:[%s10 + $0x250] sm:$0xff] %vm562, %v530
  %638 = vst.msk [vmem:[%s10 + $0x258] sm:$0xff] %vm562, %v531
  %639 = vst.msk [vmem:[%s10 + $0x260] sm:$0xff] %vm562, %v532
  %640 = vst.msk [vmem:[%s10 + $0x268] sm:$0xff] %vm562, %v533
  %641 = vst.msk [vmem:[%s10 + $0x270] sm:$0xff] %vm562, %v534
  %642 = vst.msk [vmem:[%s10 + $0x278] sm:$0xff] %vm562, %v535
  %643 = vst.msk [vmem:[%s10 + $0x280] sm:$0xff] %vm562, %v536
  %644 = vst.msk [vmem:[%s10 + $0x288] sm:$0xff] %vm562, %v537
  %645 = vst.msk [vmem:[%s10 + $0x290] sm:$0xff] %vm562, %v538
  %646 = vst.msk [vmem:[%s10 + $0x298] sm:$0xff] %vm562, %v539
  %647 = vst.msk [vmem:[%s10 + $0x2a0] sm:$0xff] %vm562, %v540
  %648 = vst.msk [vmem:[%s10 + $0x2a8] sm:$0xff] %vm562, %v541
  %649 = vst.msk [vmem:[%s10 + $0x2b0] sm:$0xff] %vm562, %v542
  %650 = vst.msk [vmem:[%s10 + $0x2b8] sm:$0xff] %vm562, %v543
  %651 = vst.msk [vmem:[%s10 + $0x2c0] sm:$0xff] %vm562, %v544
  %652 = vst.msk [vmem:[%s10 + $0x2c8] sm:$0xff] %vm562, %v545
  %653 = vst.msk [vmem:[%s10 + $0x2d0] sm:$0xff] %vm562, %v546
  %654 = vst.msk [vmem:[%s10 + $0x2d8] sm:$0xff] %vm562, %v547
  %655 = vst.msk [vmem:[%s10 + $0x2e0] sm:$0xff] %vm562, %v548
  %656 = vst.msk [vmem:[%s10 + $0x2e8] sm:$0xff] %vm562, %v549
  %657 = vst.msk [vmem:[%s10 + $0x2f0] sm:$0xff] %vm562, %v550
  %658 = vst.msk [vmem:[%s10 + $0x2f8] sm:$0xff] %vm562, %v551
  %659 = vst.msk [vmem:[%s10 + $0x300] sm:$0xff] %vm562, %v552
  %660 = vst.msk [vmem:[%s10 + $0x308] sm:$0xff] %vm562, %v553
  %661 = vst.msk [vmem:[%s10 + $0x310] sm:$0xff] %vm562, %v554
  %662 = vst.msk [vmem:[%s10 + $0x318] sm:$0xff] %vm562, %v555
  %663 = vst.msk [vmem:[%s10 + $0x320] sm:$0xff] %vm562, %v556
  %664 = vst.msk [vmem:[%s10 + $0x328] sm:$0xff] %vm562, %v557
  %665 = vst.msk [vmem:[%s10 + $0x330] sm:$0xff] %vm562, %v558
  %666 = vst.msk [vmem:[%s10 + $0x338] sm:$0xff] %vm562, %v559
  %667 = vst.msk [vmem:[%s10 + $0x340] sm:$0xff] %vm562, %v560
  %668 = vst.msk [vmem:[%s10 + $0x348] sm:$0xff] %vm562, %v561
  %v669 = vld [vmem:[%s0] sm:$0xff]
  %v670 = vld [vmem:[%s0 + $0x8] sm:$0xff]
  %v671 = vld [vmem:[%s0 + $0x10] sm:$0xff]
  %v672 = vld [vmem:[%s0 + $0x18] sm:$0xff]
  %v673 = vld [vmem:[%s0 + $0x20] sm:$0xff]
  %v674 = vld [vmem:[%s0 + $0x28] sm:$0xff]
  %v675 = vld [vmem:[%s2] sm:$0xff]
  %v676 = vld [vmem:[%s2 + $0x8] sm:$0xff]
  %v677 = vld [vmem:[%s2 + $0x10] sm:$0xff]
  %v678 = vld [vmem:[%s2 + $0x18] sm:$0xff]
  %v679 = vld [vmem:[%s2 + $0x20] sm:$0xff]
  %v680 = vld [vmem:[%s2 + $0x28] sm:$0xff]
  %v681 = vld [vmem:[%s2 + $0x30] sm:$0xff]
  %v682 = vld [vmem:[%s2 + $0x38] sm:$0xff]
  %v683 = vld [vmem:[%s2 + $0x40] sm:$0xff]
  %v684 = vld [vmem:[%s2 + $0x48] sm:$0xff]
  %v685 = vld [vmem:[%s2 + $0x50] sm:$0xff]
  %v686 = vld [vmem:[%s2 + $0x58] sm:$0xff]
  %v687 = vld [vmem:[%s2 + $0x60] sm:$0xff]
  %v688 = vld [vmem:[%s2 + $0x68] sm:$0xff]
  %v689 = vld [vmem:[%s2 + $0x70] sm:$0xff]
  %v690 = vld [vmem:[%s2 + $0x78] sm:$0xff]
  %v691 = vld [vmem:[%s2 + $0x80] sm:$0xff]
  %v692 = vld [vmem:[%s2 + $0x88] sm:$0xff]
  %v693 = vld [vmem:[%s2 + $0x90] sm:$0xff]
  %v694 = vld [vmem:[%s2 + $0x98] sm:$0xff]
  %v695 = vld [vmem:[%s2 + $0xa0] sm:$0xff]
  %v696 = vld [vmem:[%s2 + $0xa8] sm:$0xff]
  %v697 = vld [vmem:[%s2 + $0xb0] sm:$0xff]
  %v698 = vld [vmem:[%s2 + $0xb8] sm:$0xff]
  %v699 = vld [vmem:[%s2 + $0xc0] sm:$0xff]
  %v700 = vld [vmem:[%s2 + $0xc8] sm:$0xff]
  %v701 = vld [vmem:[%s2 + $0xd0] sm:$0xff]
  %v702 = vld [vmem:[%s2 + $0xd8] sm:$0xff]
  %v703 = vld [vmem:[%s2 + $0xe0] sm:$0xff]
  %v704 = vld [vmem:[%s2 + $0xe8] sm:$0xff]
  %v705 = vld [vmem:[%s2 + $0xf0] sm:$0xff]
  %v706 = vld [vmem:[%s2 + $0xf8] sm:$0xff]
  %v707 = vld [vmem:[%s2 + $0x100] sm:$0xff]
  %v708 = vld [vmem:[%s2 + $0x108] sm:$0xff]
  %v709 = vld [vmem:[%s2 + $0x110] sm:$0xff]
  %v710 = vld [vmem:[%s2 + $0x118] sm:$0xff]
  %v711 = vld [vmem:[%s2 + $0x120] sm:$0xff]
  %v712 = vld [vmem:[%s2 + $0x128] sm:$0xff]
  %v713 = vld [vmem:[%s2 + $0x130] sm:$0xff]
  %v714 = vld [vmem:[%s2 + $0x138] sm:$0xff]
  %v715 = vld [vmem:[%s2 + $0x140] sm:$0xff]
  %v716 = vld [vmem:[%s2 + $0x148] sm:$0xff]
  %v717 = vld [vmem:[%s2 + $0x150] sm:$0xff]
  %v718 = vld [vmem:[%s2 + $0x158] sm:$0xff]
  %v719 = vld [vmem:[%s2 + $0x160] sm:$0xff]
  %v720 = vld [vmem:[%s2 + $0x168] sm:$0xff]
  %v721 = vld [vmem:[%s2 + $0x170] sm:$0xff]
  %v722 = vld [vmem:[%s2 + $0x178] sm:$0xff]
  %v723 = vld [vmem:[%s2 + $0x180] sm:$0xff]
  %v724 = vld [vmem:[%s2 + $0x188] sm:$0xff]
  %v725 = vld [vmem:[%s2 + $0x190] sm:$0xff]
  %v726 = vld [vmem:[%s2 + $0x198] sm:$0xff]
  %v727 = vld [vmem:[%s2 + $0x1a0] sm:$0xff]
  %v728 = vld [vmem:[%s2 + $0x1a8] sm:$0xff]
  %v729 = vld [vmem:[%s2 + $0x1b0] sm:$0xff]
  %v730 = vld [vmem:[%s2 + $0x1b8] sm:$0xff]
  %v731 = vld [vmem:[%s2 + $0x1c0] sm:$0xff]
  %v732 = vld [vmem:[%s2 + $0x1c8] sm:$0xff]
  %v733 = vld [vmem:[%s2 + $0x1d0] sm:$0xff]
  %v734 = vld [vmem:[%s2 + $0x1d8] sm:$0xff]
  %v735 = vld [vmem:[%s2 + $0x1e0] sm:$0xff]
  %v736 = vld [vmem:[%s2 + $0x1e8] sm:$0xff]
  %v737 = vld [vmem:[%s2 + $0x1f0] sm:$0xff]
  %v738 = vld [vmem:[%s2 + $0x1f8] sm:$0xff]
  %v739 = vld [vmem:[%s2 + $0x200] sm:$0xff]
  %v740 = vld [vmem:[%s2 + $0x208] sm:$0xff]
  %v741 = vld [vmem:[%s2 + $0x210] sm:$0xff]
  %v742 = vld [vmem:[%s2 + $0x218] sm:$0xff]
  %v743 = vld [vmem:[%s2 + $0x220] sm:$0xff]
  %v744 = vld [vmem:[%s2 + $0x228] sm:$0xff]
  %v745 = vld [vmem:[%s2 + $0x230] sm:$0xff]
  %v746 = vld [vmem:[%s2 + $0x238] sm:$0xff]
  %v747 = vld [vmem:[%s2 + $0x240] sm:$0xff]
  %v748 = vld [vmem:[%s2 + $0x248] sm:$0xff]
  %v749 = vld [vmem:[%s2 + $0x250] sm:$0xff]
  %v750 = vld [vmem:[%s2 + $0x258] sm:$0xff]
  %v751 = vld [vmem:[%s2 + $0x260] sm:$0xff]
  %v752 = vld [vmem:[%s2 + $0x268] sm:$0xff]
  %v753 = vld [vmem:[%s2 + $0x270] sm:$0xff]
  %v754 = vld [vmem:[%s2 + $0x278] sm:$0xff]
  %v755 = vld [vmem:[%s2 + $0x280] sm:$0xff]
  %v756 = vld [vmem:[%s2 + $0x288] sm:$0xff]
  %v757 = vld [vmem:[%s2 + $0x290] sm:$0xff]
  %v758 = vld [vmem:[%s2 + $0x298] sm:$0xff]
  %v759 = vld [vmem:[%s2 + $0x2a0] sm:$0xff]
  %v760 = vld [vmem:[%s2 + $0x2a8] sm:$0xff]
  %v761 = vld [vmem:[%s2 + $0x2b0] sm:$0xff]
  %v762 = vld [vmem:[%s2 + $0x2b8] sm:$0xff]
  %v763 = vld [vmem:[%s2 + $0x2c0] sm:$0xff]
  %v764 = vld [vmem:[%s2 + $0x2c8] sm:$0xff]
  %v765 = vld [vmem:[%s2 + $0x2d0] sm:$0xff]
  %v766 = vld [vmem:[%s2 + $0x2d8] sm:$0xff]
  %v767 = vld [vmem:[%s2 + $0x2e0] sm:$0xff]
  %v768 = vld [vmem:[%s2 + $0x2e8] sm:$0xff]
  %v769 = vld [vmem:[%s2 + $0x2f0] sm:$0xff]
  %v770 = vld [vmem:[%s2 + $0x2f8] sm:$0xff]
  %v771 = vld [vmem:[%s2 + $0x300] sm:$0x1]
  %v772 = vlaneseq
  %v773 = vshrl.u32 %v772, 7
  %v774 = vsub.s32 0, %v773
  %v775 = vrot.slane %v771, %v774
  %776 = vmatprep.subr.mxu0 0.0
  %777 = vmatpush1.msra.mxu0 %v675
  %778 = vmatprep.subr.mxu0 0.0
  %779 = vmatpush1.msra.mxu0 %v676
  %780 = vmatprep.subr.mxu0 0.0
  %781 = vmatpush1.msra.mxu0 %v677
  %782 = vmatprep.subr.mxu0 0.0
  %783 = vmatpush1.msra.mxu0 %v678
  %784 = vmatprep.subr.mxu0 0.0
  %785 = vmatpush1.msra.mxu0 %v679
  %786 = vmatprep.subr.mxu0 0.0
  %787 = vmatpush1.msra.mxu0 %v680
  %788 = vmatprep.subr.mxu0 0.0
  %789 = vmatpush1.msra.mxu0 %v681
  %790 = vmatprep.subr.mxu0 0.0
  %791 = vmatpush1.msra.mxu0 %v682
  %792 = vmatprep.subr.mxu0 0.0
  %793 = vmatpush1.msra.mxu0 %v683
  %794 = vmatprep.subr.mxu0 0.0
  %795 = vmatpush1.msra.mxu0 %v684
  %796 = vmatprep.subr.mxu0 0.0
  %797 = vmatpush1.msra.mxu0 %v685
  %798 = vmatprep.subr.mxu0 0.0
  %799 = vmatpush1.msra.mxu0 %v686
  %800 = vmatprep.subr.mxu0 0.0
  %801 = vmatpush1.msra.mxu0 %v687
  %802 = vmatprep.subr.mxu0 0.0
  %803 = vmatpush1.msra.mxu0 %v688
  %804 = vmatprep.subr.mxu0 0.0
  %805 = vmatpush1.msra.mxu0 %v689
  %806 = vmatprep.subr.mxu0 0.0
  %807 = vmatpush1.msra.mxu0 %v690
  %808 = vmatprep.subr.mxu0 0.0
  %809 = vmatpush1.msra.mxu0 %v691
  %810 = vmatprep.subr.mxu0 0.0
  %811 = vmatpush1.msra.mxu0 %v692
  %812 = vmatprep.subr.mxu0 0.0
  %813 = vmatpush1.msra.mxu0 %v693
  %814 = vmatprep.subr.mxu0 0.0
  %815 = vmatpush1.msra.mxu0 %v694
  %816 = vmatprep.subr.mxu0 0.0
  %817 = vmatpush1.msra.mxu0 %v695
  %818 = vmatprep.subr.mxu0 0.0
  %819 = vmatpush1.msra.mxu0 %v696
  %820 = vmatprep.subr.mxu0 0.0
  %821 = vmatpush1.msra.mxu0 %v697
  %822 = vmatprep.subr.mxu0 0.0
  %823 = vmatpush1.msra.mxu0 %v698
  %824 = vmatprep.subr.mxu0 0.0
  %825 = vmatpush1.msra.mxu0 %v699
  %826 = vmatprep.subr.mxu0 0.0
  %827 = vmatpush1.msra.mxu0 %v700
  %828 = vmatprep.subr.mxu0 0.0
  %829 = vmatpush1.msra.mxu0 %v701
  %830 = vmatprep.subr.mxu0 0.0
  %831 = vmatpush1.msra.mxu0 %v702
  %832 = vmatprep.subr.mxu0 0.0
  %833 = vmatpush1.msra.mxu0 %v703
  %834 = vmatprep.subr.mxu0 0.0
  %835 = vmatpush1.msra.mxu0 %v704
  %836 = vmatprep.subr.mxu0 0.0
  %837 = vmatpush1.msra.mxu0 %v705
  %838 = vmatprep.subr.mxu0 0.0
  %839 = vmatpush1.msra.mxu0 %v706
  %840 = vmatprep.mubr.f32.mxu0 %v670
  %841 = vmatmul.mubr.f32.gmra.mrb[0].mxu0 %v669
  %v842 = vpop.f32.mrb[0].mxu0
  %v843 = vadd.f32 %v775, %v842
  %v844 = vpop.f32.mrb[0].mxu0
  %845 = vdwg.mxu0
  %846 = vmatprep.subr.mxu0 0.0
  %847 = vmatpush1.msra.mxu0 %v707
  %848 = vmatprep.subr.mxu0 0.0
  %849 = vmatpush1.msra.mxu0 %v708
  %850 = vmatprep.subr.mxu0 0.0
  %851 = vmatpush1.msra.mxu0 %v709
  %852 = vmatprep.subr.mxu0 0.0
  %853 = vmatpush1.msra.mxu0 %v710
  %854 = vmatprep.subr.mxu0 0.0
  %855 = vmatpush1.msra.mxu0 %v711
  %856 = vmatprep.subr.mxu0 0.0
  %857 = vmatpush1.msra.mxu0 %v712
  %858 = vmatprep.subr.mxu0 0.0
  %859 = vmatpush1.msra.mxu0 %v713
  %860 = vmatprep.subr.mxu0 0.0
  %861 = vmatpush1.msra.mxu0 %v714
  %862 = vmatprep.subr.mxu0 0.0
  %863 = vmatpush1.msra.mxu0 %v715
  %864 = vmatprep.subr.mxu0 0.0
  %865 = vmatpush1.msra.mxu0 %v716
  %866 = vmatprep.subr.mxu0 0.0
  %867 = vmatpush1.msra.mxu0 %v717
  %868 = vmatprep.subr.mxu0 0.0
  %869 = vmatpush1.msra.mxu0 %v718
  %870 = vmatprep.subr.mxu0 0.0
  %871 = vmatpush1.msra.mxu0 %v719
  %872 = vmatprep.subr.mxu0 0.0
  %873 = vmatpush1.msra.mxu0 %v720
  %874 = vmatprep.subr.mxu0 0.0
  %875 = vmatpush1.msra.mxu0 %v721
  %876 = vmatprep.subr.mxu0 0.0
  %877 = vmatpush1.msra.mxu0 %v722
  %878 = vmatprep.subr.mxu0 0.0
  %879 = vmatpush1.msra.mxu0 %v723
  %880 = vmatprep.subr.mxu0 0.0
  %881 = vmatpush1.msra.mxu0 %v724
  %882 = vmatprep.subr.mxu0 0.0
  %883 = vmatpush1.msra.mxu0 %v725
  %884 = vmatprep.subr.mxu0 0.0
  %885 = vmatpush1.msra.mxu0 %v726
  %886 = vmatprep.subr.mxu0 0.0
  %887 = vmatpush1.msra.mxu0 %v727
  %888 = vmatprep.subr.mxu0 0.0
  %889 = vmatpush1.msra.mxu0 %v728
  %890 = vmatprep.subr.mxu0 0.0
  %891 = vmatpush1.msra.mxu0 %v729
  %892 = vmatprep.subr.mxu0 0.0
  %893 = vmatpush1.msra.mxu0 %v730
  %894 = vmatprep.subr.mxu0 0.0
  %895 = vmatpush1.msra.mxu0 %v731
  %896 = vmatprep.subr.mxu0 0.0
  %897 = vmatpush1.msra.mxu0 %v732
  %898 = vmatprep.subr.mxu0 0.0
  %899 = vmatpush1.msra.mxu0 %v733
  %900 = vmatprep.subr.mxu0 0.0
  %901 = vmatpush1.msra.mxu0 %v734
  %902 = vmatprep.subr.mxu0 0.0
  %903 = vmatpush1.msra.mxu0 %v735
  %904 = vmatprep.subr.mxu0 0.0
  %905 = vmatpush1.msra.mxu0 %v736
  %906 = vmatprep.subr.mxu0 0.0
  %907 = vmatpush1.msra.mxu0 %v737
  %908 = vmatprep.subr.mxu0 0.0
  %909 = vmatpush1.msra.mxu0 %v738
  %910 = vmatprep.mubr.f32.mxu0 %v672
  %911 = vmatmul.mubr.f32.gmra.mrb[0].mxu0 %v671
  %v912 = vpop.f32.mrb[0].mxu0
  %v913 = vadd.f32 %v843, %v912
  %v914 = vpop.f32.mrb[0].mxu0
  %915 = vdwg.mxu0
  %916 = vmatprep.subr.mxu0 0.0
  %917 = vmatpush1.msra.mxu0 %v739
  %918 = vmatprep.subr.mxu0 0.0
  %919 = vmatpush1.msra.mxu0 %v740
  %920 = vmatprep.subr.mxu0 0.0
  %921 = vmatpush1.msra.mxu0 %v741
  %922 = vmatprep.subr.mxu0 0.0
  %923 = vmatpush1.msra.mxu0 %v742
  %924 = vmatprep.subr.mxu0 0.0
  %925 = vmatpush1.msra.mxu0 %v743
  %926 = vmatprep.subr.mxu0 0.0
  %927 = vmatpush1.msra.mxu0 %v744
  %928 = vmatprep.subr.mxu0 0.0
  %929 = vmatpush1.msra.mxu0 %v745
  %930 = vmatprep.subr.mxu0 0.0
  %931 = vmatpush1.msra.mxu0 %v746
  %932 = vmatprep.subr.mxu0 0.0
  %933 = vmatpush1.msra.mxu0 %v747
  %934 = vmatprep.subr.mxu0 0.0
  %935 = vmatpush1.msra.mxu0 %v748
  %936 = vmatprep.subr.mxu0 0.0
  %937 = vmatpush1.msra.mxu0 %v749
  %938 = vmatprep.subr.mxu0 0.0
  %939 = vmatpush1.msra.mxu0 %v750
  %940 = vmatprep.subr.mxu0 0.0
  %941 = vmatpush1.msra.mxu0 %v751
  %942 = vmatprep.subr.mxu0 0.0
  %943 = vmatpush1.msra.mxu0 %v752
  %944 = vmatprep.subr.mxu0 0.0
  %945 = vmatpush1.msra.mxu0 %v753
  %946 = vmatprep.subr.mxu0 0.0
  %947 = vmatpush1.msra.mxu0 %v754
  %948 = vmatprep.subr.mxu0 0.0
  %949 = vmatpush1.msra.mxu0 %v755
  %950 = vmatprep.subr.mxu0 0.0
  %951 = vmatpush1.msra.mxu0 %v756
  %952 = vmatprep.subr.mxu0 0.0
  %953 = vmatpush1.msra.mxu0 %v757
  %954 = vmatprep.subr.mxu0 0.0
  %955 = vmatpush1.msra.mxu0 %v758
  %956 = vmatprep.subr.mxu0 0.0
  %957 = vmatpush1.msra.mxu0 %v759
  %958 = vmatprep.subr.mxu0 0.0
  %959 = vmatpush1.msra.mxu0 %v760
  %960 = vmatprep.subr.mxu0 0.0
  %961 = vmatpush1.msra.mxu0 %v761
  %962 = vmatprep.subr.mxu0 0.0
  %963 = vmatpush1.msra.mxu0 %v762
  %964 = vmatprep.subr.mxu0 0.0
  %965 = vmatpush1.msra.mxu0 %v763
  %966 = vmatprep.subr.mxu0 0.0
  %967 = vmatpush1.msra.mxu0 %v764
  %968 = vmatprep.subr.mxu0 0.0
  %969 = vmatpush1.msra.mxu0 %v765
  %970 = vmatprep.subr.mxu0 0.0
  %971 = vmatpush1.msra.mxu0 %v766
  %972 = vmatprep.subr.mxu0 0.0
  %973 = vmatpush1.msra.mxu0 %v767
  %974 = vmatprep.subr.mxu0 0.0
  %975 = vmatpush1.msra.mxu0 %v768
  %976 = vmatprep.subr.mxu0 0.0
  %977 = vmatpush1.msra.mxu0 %v769
  %978 = vmatprep.subr.mxu0 0.0
  %979 = vmatpush1.msra.mxu0 %v770
  %980 = vmatprep.mubr.f32.mxu0 %v674
  %981 = vmatmul.mubr.f32.gmra.mrb[0].mxu0 %v673
  %v982 = vpop.f32.mrb[0].mxu0
  %v983 = vadd.f32 %v913, %v982
  %v984 = vpop.f32.mrb[0].mxu0
  %985 = vdwg.mxu0
  %v986 = vmax.f32 %v983, 0.0
  %v987 = vld [vmem:[%s2 + $0x308] sm:$0xff]
  %v988 = vld [vmem:[%s2 + $0x310] sm:$0xff]
  %v989 = vld [vmem:[%s2 + $0x318] sm:$0xff]
  %v990 = vld [vmem:[%s2 + $0x320] sm:$0xff]
  %v991 = vld [vmem:[%s2 + $0x328] sm:$0xff]
  %v992 = vld [vmem:[%s2 + $0x330] sm:$0xff]
  %v993 = vld [vmem:[%s2 + $0x338] sm:$0xff]
  %v994 = vld [vmem:[%s2 + $0x340] sm:$0xff]
  %v995 = vld [vmem:[%s2 + $0x348] sm:$0x1]
  %v996 = vlaneseq
  %v997 = vshrl.u32 %v996, 7
  %v998 = vsub.s32 0, %v997
  %v999 = vrot.slane %v995, %v998
  %v1001 = vsel %vm562, %v986, 0
  %1003 = vmatprep.subr.mxu0 0.0
  %1004 = vmatpush1.msra.mxu0 %v987
  %1005 = vmatprep.subr.mxu0 0.0
  %1006 = vmatpush1.msra.mxu0 %v988
  %1007 = vmatprep.subr.mxu0 0.0
  %1008 = vmatpush1.msra.mxu0 %v989
  %1009 = vmatprep.subr.mxu0 0.0
  %1010 = vmatpush1.msra.mxu0 %v990
  %1011 = vmatprep.subr.mxu0 0.0
  %1012 = vmatpush1.msra.mxu0 %v991
  %1013 = vmatprep.subr.mxu0 0.0
  %1014 = vmatpush1.msra.mxu0 %v992
  %1015 = vmatprep.subr.mxu0 0.0
  %1016 = vmatpush1.msra.mxu0 %v993
  %1017 = vmatprep.subr.mxu0 0.0
  %1018 = vmatpush1.msra.mxu0 %v994
  %1019 = vmatprep.subr.mxu0 0.0
  %1020 = vmatpush1.msra.mxu0 0.0
  %1021 = vmatprep.subr.mxu0 0.0
  %1022 = vmatpush1.msra.mxu0 0.0
  %1023 = vmatprep.subr.mxu0 0.0
  %1024 = vmatpush1.msra.mxu0 0.0
  %1025 = vmatprep.subr.mxu0 0.0
  %1026 = vmatpush1.msra.mxu0 0.0
  %1027 = vmatprep.subr.mxu0 0.0
  %1028 = vmatpush1.msra.mxu0 0.0
  %1029 = vmatprep.subr.mxu0 0.0
  %1030 = vmatpush1.msra.mxu0 0.0
  %1031 = vmatprep.subr.mxu0 0.0
  %1032 = vmatpush1.msra.mxu0 0.0
  %1033 = vmatprep.subr.mxu0 0.0
  %1034 = vmatpush1.msra.mxu0 0.0
  %1035 = vmatprep.subr.mxu0 0.0
  %1036 = vmatpush1.msra.mxu0 0.0
  %1037 = vmatprep.subr.mxu0 0.0
  %1038 = vmatpush1.msra.mxu0 0.0
  %1039 = vmatprep.subr.mxu0 0.0
  %1040 = vmatpush1.msra.mxu0 0.0
  %1041 = vmatprep.subr.mxu0 0.0
  %1042 = vmatpush1.msra.mxu0 0.0
  %1043 = vmatprep.subr.mxu0 0.0
  %1044 = vmatpush1.msra.mxu0 0.0
  %1045 = vmatprep.subr.mxu0 0.0
  %1046 = vmatpush1.msra.mxu0 0.0
  %1047 = vmatprep.subr.mxu0 0.0
  %1048 = vmatpush1.msra.mxu0 0.0
  %1049 = vmatprep.subr.mxu0 0.0
  %1050 = vmatpush1.msra.mxu0 0.0
  %1051 = vmatprep.subr.mxu0 0.0
  %1052 = vmatpush1.msra.mxu0 0.0
  %1053 = vmatprep.subr.mxu0 0.0
  %1054 = vmatpush1.msra.mxu0 0.0
  %1055 = vmatprep.subr.mxu0 0.0
  %1056 = vmatpush1.msra.mxu0 0.0
  %1057 = vmatprep.subr.mxu0 0.0
  %1058 = vmatpush1.msra.mxu0 0.0
  %1059 = vmatprep.subr.mxu0 0.0
  %1060 = vmatpush1.msra.mxu0 0.0
  %1061 = vmatprep.subr.mxu0 0.0
  %1062 = vmatpush1.msra.mxu0 0.0
  %1063 = vmatprep.subr.mxu0 0.0
  %1064 = vmatpush1.msra.mxu0 0.0
  %1065 = vmatprep.subr.mxu0 0.0
  %1066 = vmatpush1.msra.mxu0 0.0
  %1067 = vmatprep.mubr.f32.mxu0 0.0
  %1068 = vmatmul.mubr.f32.gmra.mrb[0].mxu0 %v1001
  %v1069 = vpop.f32.mrb[0].mxu0
  %v1070 = vadd.f32 %v999, %v1069
  %v1071 = vpop.f32.mrb[0].mxu0
  %1072 = vdwg.mxu0
  %v1073 = vmul.f32 %v1070, %v1070
  %1075 = vrot.lane.b32.xlu0 %v1073, 112
  %v1076 = vpop.permute.xlu0 %1075
  %vm1078 = vcmask 261120
  %v1079 = vsel %vm1078, %v1076, 0.0
  %1080 = vadd.xlane.f32.xlu0 %v1079
  %v1081 = vpop.xlane.xlu0 %1080
  %v1082 = vmax.f32 %v1081, 1e-24
  %v1083 = vrsqrt.pop %v1082
  %v1084 = vmul.f32 %v1070, %v1083
  %v1085 = vld [vmem:[%s1] sm:$0xff]
  %v1086 = vld [vmem:[%s1 + $0x8] sm:$0xff]
  %v1087 = vld [vmem:[%s1 + $0x10] sm:$0xff]
  %v1088 = vld [vmem:[%s1 + $0x18] sm:$0xff]
  %v1089 = vld [vmem:[%s1 + $0x20] sm:$0xff]
  %v1090 = vld [vmem:[%s1 + $0x28] sm:$0xff]
  %v1091 = vld [vmem:[%s10] sm:$0xff]
  %v1092 = vld [vmem:[%s10 + $0x8] sm:$0xff]
  %v1093 = vld [vmem:[%s10 + $0x10] sm:$0xff]
  %v1094 = vld [vmem:[%s10 + $0x18] sm:$0xff]
  %v1095 = vld [vmem:[%s10 + $0x20] sm:$0xff]
  %v1096 = vld [vmem:[%s10 + $0x28] sm:$0xff]
  %v1097 = vld [vmem:[%s10 + $0x30] sm:$0xff]
  %v1098 = vld [vmem:[%s10 + $0x38] sm:$0xff]
  %v1099 = vld [vmem:[%s10 + $0x40] sm:$0xff]
  %v1100 = vld [vmem:[%s10 + $0x48] sm:$0xff]
  %v1101 = vld [vmem:[%s10 + $0x50] sm:$0xff]
  %v1102 = vld [vmem:[%s10 + $0x58] sm:$0xff]
  %v1103 = vld [vmem:[%s10 + $0x60] sm:$0xff]
  %v1104 = vld [vmem:[%s10 + $0x68] sm:$0xff]
  %v1105 = vld [vmem:[%s10 + $0x70] sm:$0xff]
  %v1106 = vld [vmem:[%s10 + $0x78] sm:$0xff]
  %v1107 = vld [vmem:[%s10 + $0x80] sm:$0xff]
  %v1108 = vld [vmem:[%s10 + $0x88] sm:$0xff]
  %v1109 = vld [vmem:[%s10 + $0x90] sm:$0xff]
  %v1110 = vld [vmem:[%s10 + $0x98] sm:$0xff]
  %v1111 = vld [vmem:[%s10 + $0xa0] sm:$0xff]
  %v1112 = vld [vmem:[%s10 + $0xa8] sm:$0xff]
  %v1113 = vld [vmem:[%s10 + $0xb0] sm:$0xff]
  %v1114 = vld [vmem:[%s10 + $0xb8] sm:$0xff]
  %v1115 = vld [vmem:[%s10 + $0xc0] sm:$0xff]
  %v1116 = vld [vmem:[%s10 + $0xc8] sm:$0xff]
  %v1117 = vld [vmem:[%s10 + $0xd0] sm:$0xff]
  %v1118 = vld [vmem:[%s10 + $0xd8] sm:$0xff]
  %v1119 = vld [vmem:[%s10 + $0xe0] sm:$0xff]
  %v1120 = vld [vmem:[%s10 + $0xe8] sm:$0xff]
  %v1121 = vld [vmem:[%s10 + $0xf0] sm:$0xff]
  %v1122 = vld [vmem:[%s10 + $0xf8] sm:$0xff]
  %v1123 = vld [vmem:[%s10 + $0x100] sm:$0xff]
  %v1124 = vld [vmem:[%s10 + $0x108] sm:$0xff]
  %v1125 = vld [vmem:[%s10 + $0x110] sm:$0xff]
  %v1126 = vld [vmem:[%s10 + $0x118] sm:$0xff]
  %v1127 = vld [vmem:[%s10 + $0x120] sm:$0xff]
  %v1128 = vld [vmem:[%s10 + $0x128] sm:$0xff]
  %v1129 = vld [vmem:[%s10 + $0x130] sm:$0xff]
  %v1130 = vld [vmem:[%s10 + $0x138] sm:$0xff]
  %v1131 = vld [vmem:[%s10 + $0x140] sm:$0xff]
  %v1132 = vld [vmem:[%s10 + $0x148] sm:$0xff]
  %v1133 = vld [vmem:[%s10 + $0x150] sm:$0xff]
  %v1134 = vld [vmem:[%s10 + $0x158] sm:$0xff]
  %v1135 = vld [vmem:[%s10 + $0x160] sm:$0xff]
  %v1136 = vld [vmem:[%s10 + $0x168] sm:$0xff]
  %v1137 = vld [vmem:[%s10 + $0x170] sm:$0xff]
  %v1138 = vld [vmem:[%s10 + $0x178] sm:$0xff]
  %v1139 = vld [vmem:[%s10 + $0x180] sm:$0xff]
  %v1140 = vld [vmem:[%s10 + $0x188] sm:$0xff]
  %v1141 = vld [vmem:[%s10 + $0x190] sm:$0xff]
  %v1142 = vld [vmem:[%s10 + $0x198] sm:$0xff]
  %v1143 = vld [vmem:[%s10 + $0x1a0] sm:$0xff]
  %v1144 = vld [vmem:[%s10 + $0x1a8] sm:$0xff]
  %v1145 = vld [vmem:[%s10 + $0x1b0] sm:$0xff]
  %v1146 = vld [vmem:[%s10 + $0x1b8] sm:$0xff]
  %v1147 = vld [vmem:[%s10 + $0x1c0] sm:$0xff]
  %v1148 = vld [vmem:[%s10 + $0x1c8] sm:$0xff]
  %v1149 = vld [vmem:[%s10 + $0x1d0] sm:$0xff]
  %v1150 = vld [vmem:[%s10 + $0x1d8] sm:$0xff]
  %v1151 = vld [vmem:[%s10 + $0x1e0] sm:$0xff]
  %v1152 = vld [vmem:[%s10 + $0x1e8] sm:$0xff]
  %v1153 = vld [vmem:[%s10 + $0x1f0] sm:$0xff]
  %v1154 = vld [vmem:[%s10 + $0x1f8] sm:$0xff]
  %v1155 = vld [vmem:[%s10 + $0x200] sm:$0xff]
  %v1156 = vld [vmem:[%s10 + $0x208] sm:$0xff]
  %v1157 = vld [vmem:[%s10 + $0x210] sm:$0xff]
  %v1158 = vld [vmem:[%s10 + $0x218] sm:$0xff]
  %v1159 = vld [vmem:[%s10 + $0x220] sm:$0xff]
  %v1160 = vld [vmem:[%s10 + $0x228] sm:$0xff]
  %v1161 = vld [vmem:[%s10 + $0x230] sm:$0xff]
  %v1162 = vld [vmem:[%s10 + $0x238] sm:$0xff]
  %v1163 = vld [vmem:[%s10 + $0x240] sm:$0xff]
  %v1164 = vld [vmem:[%s10 + $0x248] sm:$0xff]
  %v1165 = vld [vmem:[%s10 + $0x250] sm:$0xff]
  %v1166 = vld [vmem:[%s10 + $0x258] sm:$0xff]
  %v1167 = vld [vmem:[%s10 + $0x260] sm:$0xff]
  %v1168 = vld [vmem:[%s10 + $0x268] sm:$0xff]
  %v1169 = vld [vmem:[%s10 + $0x270] sm:$0xff]
  %v1170 = vld [vmem:[%s10 + $0x278] sm:$0xff]
  %v1171 = vld [vmem:[%s10 + $0x280] sm:$0xff]
  %v1172 = vld [vmem:[%s10 + $0x288] sm:$0xff]
  %v1173 = vld [vmem:[%s10 + $0x290] sm:$0xff]
  %v1174 = vld [vmem:[%s10 + $0x298] sm:$0xff]
  %v1175 = vld [vmem:[%s10 + $0x2a0] sm:$0xff]
  %v1176 = vld [vmem:[%s10 + $0x2a8] sm:$0xff]
  %v1177 = vld [vmem:[%s10 + $0x2b0] sm:$0xff]
  %v1178 = vld [vmem:[%s10 + $0x2b8] sm:$0xff]
  %v1179 = vld [vmem:[%s10 + $0x2c0] sm:$0xff]
  %v1180 = vld [vmem:[%s10 + $0x2c8] sm:$0xff]
  %v1181 = vld [vmem:[%s10 + $0x2d0] sm:$0xff]
  %v1182 = vld [vmem:[%s10 + $0x2d8] sm:$0xff]
  %v1183 = vld [vmem:[%s10 + $0x2e0] sm:$0xff]
  %v1184 = vld [vmem:[%s10 + $0x2e8] sm:$0xff]
  %v1185 = vld [vmem:[%s10 + $0x2f0] sm:$0xff]
  %v1186 = vld [vmem:[%s10 + $0x2f8] sm:$0xff]
  %v1187 = vld [vmem:[%s10 + $0x300] sm:$0x1]
  %v1188 = vlaneseq
  %v1189 = vshrl.u32 %v1188, 7
  %v1190 = vsub.s32 0, %v1189
  %v1191 = vrot.slane %v1187, %v1190
  %1192 = vmatprep.subr.mxu0 0.0
  %1193 = vmatpush1.msra.mxu0 %v1091
  %1194 = vmatprep.subr.mxu0 0.0
  %1195 = vmatpush1.msra.mxu0 %v1092
  %1196 = vmatprep.subr.mxu0 0.0
  %1197 = vmatpush1.msra.mxu0 %v1093
  %1198 = vmatprep.subr.mxu0 0.0
  %1199 = vmatpush1.msra.mxu0 %v1094
  %1200 = vmatprep.subr.mxu0 0.0
  %1201 = vmatpush1.msra.mxu0 %v1095
  %1202 = vmatprep.subr.mxu0 0.0
  %1203 = vmatpush1.msra.mxu0 %v1096
  %1204 = vmatprep.subr.mxu0 0.0
  %1205 = vmatpush1.msra.mxu0 %v1097
  %1206 = vmatprep.subr.mxu0 0.0
  %1207 = vmatpush1.msra.mxu0 %v1098
  %1208 = vmatprep.subr.mxu0 0.0
  %1209 = vmatpush1.msra.mxu0 %v1099
  %1210 = vmatprep.subr.mxu0 0.0
  %1211 = vmatpush1.msra.mxu0 %v1100
  %1212 = vmatprep.subr.mxu0 0.0
  %1213 = vmatpush1.msra.mxu0 %v1101
  %1214 = vmatprep.subr.mxu0 0.0
  %1215 = vmatpush1.msra.mxu0 %v1102
  %1216 = vmatprep.subr.mxu0 0.0
  %1217 = vmatpush1.msra.mxu0 %v1103
  %1218 = vmatprep.subr.mxu0 0.0
  %1219 = vmatpush1.msra.mxu0 %v1104
  %1220 = vmatprep.subr.mxu0 0.0
  %1221 = vmatpush1.msra.mxu0 %v1105
  %1222 = vmatprep.subr.mxu0 0.0
  %1223 = vmatpush1.msra.mxu0 %v1106
  %1224 = vmatprep.subr.mxu0 0.0
  %1225 = vmatpush1.msra.mxu0 %v1107
  %1226 = vmatprep.subr.mxu0 0.0
  %1227 = vmatpush1.msra.mxu0 %v1108
  %1228 = vmatprep.subr.mxu0 0.0
  %1229 = vmatpush1.msra.mxu0 %v1109
  %1230 = vmatprep.subr.mxu0 0.0
  %1231 = vmatpush1.msra.mxu0 %v1110
  %1232 = vmatprep.subr.mxu0 0.0
  %1233 = vmatpush1.msra.mxu0 %v1111
  %1234 = vmatprep.subr.mxu0 0.0
  %1235 = vmatpush1.msra.mxu0 %v1112
  %1236 = vmatprep.subr.mxu0 0.0
  %1237 = vmatpush1.msra.mxu0 %v1113
  %1238 = vmatprep.subr.mxu0 0.0
  %1239 = vmatpush1.msra.mxu0 %v1114
  %1240 = vmatprep.subr.mxu0 0.0
  %1241 = vmatpush1.msra.mxu0 %v1115
  %1242 = vmatprep.subr.mxu0 0.0
  %1243 = vmatpush1.msra.mxu0 %v1116
  %1244 = vmatprep.subr.mxu0 0.0
  %1245 = vmatpush1.msra.mxu0 %v1117
  %1246 = vmatprep.subr.mxu0 0.0
  %1247 = vmatpush1.msra.mxu0 %v1118
  %1248 = vmatprep.subr.mxu0 0.0
  %1249 = vmatpush1.msra.mxu0 %v1119
  %1250 = vmatprep.subr.mxu0 0.0
  %1251 = vmatpush1.msra.mxu0 %v1120
  %1252 = vmatprep.subr.mxu0 0.0
  %1253 = vmatpush1.msra.mxu0 %v1121
  %1254 = vmatprep.subr.mxu0 0.0
  %1255 = vmatpush1.msra.mxu0 %v1122
  %1256 = vmatprep.mubr.f32.mxu0 %v1086
  %1257 = vmatmul.mubr.f32.gmra.mrb[0].mxu0 %v1085
  %v1258 = vpop.f32.mrb[0].mxu0
  %v1259 = vadd.f32 %v1191, %v1258
  %v1260 = vpop.f32.mrb[0].mxu0
  %1261 = vdwg.mxu0
  %1262 = vmatprep.subr.mxu0 0.0
  %1263 = vmatpush1.msra.mxu0 %v1123
  %1264 = vmatprep.subr.mxu0 0.0
  %1265 = vmatpush1.msra.mxu0 %v1124
  %1266 = vmatprep.subr.mxu0 0.0
  %1267 = vmatpush1.msra.mxu0 %v1125
  %1268 = vmatprep.subr.mxu0 0.0
  %1269 = vmatpush1.msra.mxu0 %v1126
  %1270 = vmatprep.subr.mxu0 0.0
  %1271 = vmatpush1.msra.mxu0 %v1127
  %1272 = vmatprep.subr.mxu0 0.0
  %1273 = vmatpush1.msra.mxu0 %v1128
  %1274 = vmatprep.subr.mxu0 0.0
  %1275 = vmatpush1.msra.mxu0 %v1129
  %1276 = vmatprep.subr.mxu0 0.0
  %1277 = vmatpush1.msra.mxu0 %v1130
  %1278 = vmatprep.subr.mxu0 0.0
  %1279 = vmatpush1.msra.mxu0 %v1131
  %1280 = vmatprep.subr.mxu0 0.0
  %1281 = vmatpush1.msra.mxu0 %v1132
  %1282 = vmatprep.subr.mxu0 0.0
  %1283 = vmatpush1.msra.mxu0 %v1133
  %1284 = vmatprep.subr.mxu0 0.0
  %1285 = vmatpush1.msra.mxu0 %v1134
  %1286 = vmatprep.subr.mxu0 0.0
  %1287 = vmatpush1.msra.mxu0 %v1135
  %1288 = vmatprep.subr.mxu0 0.0
  %1289 = vmatpush1.msra.mxu0 %v1136
  %1290 = vmatprep.subr.mxu0 0.0
  %1291 = vmatpush1.msra.mxu0 %v1137
  %1292 = vmatprep.subr.mxu0 0.0
  %1293 = vmatpush1.msra.mxu0 %v1138
  %1294 = vmatprep.subr.mxu0 0.0
  %1295 = vmatpush1.msra.mxu0 %v1139
  %1296 = vmatprep.subr.mxu0 0.0
  %1297 = vmatpush1.msra.mxu0 %v1140
  %1298 = vmatprep.subr.mxu0 0.0
  %1299 = vmatpush1.msra.mxu0 %v1141
  %1300 = vmatprep.subr.mxu0 0.0
  %1301 = vmatpush1.msra.mxu0 %v1142
  %1302 = vmatprep.subr.mxu0 0.0
  %1303 = vmatpush1.msra.mxu0 %v1143
  %1304 = vmatprep.subr.mxu0 0.0
  %1305 = vmatpush1.msra.mxu0 %v1144
  %1306 = vmatprep.subr.mxu0 0.0
  %1307 = vmatpush1.msra.mxu0 %v1145
  %1308 = vmatprep.subr.mxu0 0.0
  %1309 = vmatpush1.msra.mxu0 %v1146
  %1310 = vmatprep.subr.mxu0 0.0
  %1311 = vmatpush1.msra.mxu0 %v1147
  %1312 = vmatprep.subr.mxu0 0.0
  %1313 = vmatpush1.msra.mxu0 %v1148
  %1314 = vmatprep.subr.mxu0 0.0
  %1315 = vmatpush1.msra.mxu0 %v1149
  %1316 = vmatprep.subr.mxu0 0.0
  %1317 = vmatpush1.msra.mxu0 %v1150
  %1318 = vmatprep.subr.mxu0 0.0
  %1319 = vmatpush1.msra.mxu0 %v1151
  %1320 = vmatprep.subr.mxu0 0.0
  %1321 = vmatpush1.msra.mxu0 %v1152
  %1322 = vmatprep.subr.mxu0 0.0
  %1323 = vmatpush1.msra.mxu0 %v1153
  %1324 = vmatprep.subr.mxu0 0.0
  %1325 = vmatpush1.msra.mxu0 %v1154
  %1326 = vmatprep.mubr.f32.mxu0 %v1088
  %1327 = vmatmul.mubr.f32.gmra.mrb[0].mxu0 %v1087
  %v1328 = vpop.f32.mrb[0].mxu0
  %v1329 = vadd.f32 %v1259, %v1328
  %v1330 = vpop.f32.mrb[0].mxu0
  %1331 = vdwg.mxu0
  %1332 = vmatprep.subr.mxu0 0.0
  %1333 = vmatpush1.msra.mxu0 %v1155
  %1334 = vmatprep.subr.mxu0 0.0
  %1335 = vmatpush1.msra.mxu0 %v1156
  %1336 = vmatprep.subr.mxu0 0.0
  %1337 = vmatpush1.msra.mxu0 %v1157
  %1338 = vmatprep.subr.mxu0 0.0
  %1339 = vmatpush1.msra.mxu0 %v1158
  %1340 = vmatprep.subr.mxu0 0.0
  %1341 = vmatpush1.msra.mxu0 %v1159
  %1342 = vmatprep.subr.mxu0 0.0
  %1343 = vmatpush1.msra.mxu0 %v1160
  %1344 = vmatprep.subr.mxu0 0.0
  %1345 = vmatpush1.msra.mxu0 %v1161
  %1346 = vmatprep.subr.mxu0 0.0
  %1347 = vmatpush1.msra.mxu0 %v1162
  %1348 = vmatprep.subr.mxu0 0.0
  %1349 = vmatpush1.msra.mxu0 %v1163
  %1350 = vmatprep.subr.mxu0 0.0
  %1351 = vmatpush1.msra.mxu0 %v1164
  %1352 = vmatprep.subr.mxu0 0.0
  %1353 = vmatpush1.msra.mxu0 %v1165
  %1354 = vmatprep.subr.mxu0 0.0
  %1355 = vmatpush1.msra.mxu0 %v1166
  %1356 = vmatprep.subr.mxu0 0.0
  %1357 = vmatpush1.msra.mxu0 %v1167
  %1358 = vmatprep.subr.mxu0 0.0
  %1359 = vmatpush1.msra.mxu0 %v1168
  %1360 = vmatprep.subr.mxu0 0.0
  %1361 = vmatpush1.msra.mxu0 %v1169
  %1362 = vmatprep.subr.mxu0 0.0
  %1363 = vmatpush1.msra.mxu0 %v1170
  %1364 = vmatprep.subr.mxu0 0.0
  %1365 = vmatpush1.msra.mxu0 %v1171
  %1366 = vmatprep.subr.mxu0 0.0
  %1367 = vmatpush1.msra.mxu0 %v1172
  %1368 = vmatprep.subr.mxu0 0.0
  %1369 = vmatpush1.msra.mxu0 %v1173
  %1370 = vmatprep.subr.mxu0 0.0
  %1371 = vmatpush1.msra.mxu0 %v1174
  %1372 = vmatprep.subr.mxu0 0.0
  %1373 = vmatpush1.msra.mxu0 %v1175
  %1374 = vmatprep.subr.mxu0 0.0
  %1375 = vmatpush1.msra.mxu0 %v1176
  %1376 = vmatprep.subr.mxu0 0.0
  %1377 = vmatpush1.msra.mxu0 %v1177
  %1378 = vmatprep.subr.mxu0 0.0
  %1379 = vmatpush1.msra.mxu0 %v1178
  %1380 = vmatprep.subr.mxu0 0.0
  %1381 = vmatpush1.msra.mxu0 %v1179
  %1382 = vmatprep.subr.mxu0 0.0
  %1383 = vmatpush1.msra.mxu0 %v1180
  %1384 = vmatprep.subr.mxu0 0.0
  %1385 = vmatpush1.msra.mxu0 %v1181
  %1386 = vmatprep.subr.mxu0 0.0
  %1387 = vmatpush1.msra.mxu0 %v1182
  %1388 = vmatprep.subr.mxu0 0.0
  %1389 = vmatpush1.msra.mxu0 %v1183
  %1390 = vmatprep.subr.mxu0 0.0
  %1391 = vmatpush1.msra.mxu0 %v1184
  %1392 = vmatprep.subr.mxu0 0.0
  %1393 = vmatpush1.msra.mxu0 %v1185
  %1394 = vmatprep.subr.mxu0 0.0
  %1395 = vmatpush1.msra.mxu0 %v1186
  %1396 = vmatprep.mubr.f32.mxu0 %v1090
  %1397 = vmatmul.mubr.f32.gmra.mrb[0].mxu0 %v1089
  %v1398 = vpop.f32.mrb[0].mxu0
  %v1399 = vadd.f32 %v1329, %v1398
  %v1400 = vpop.f32.mrb[0].mxu0
  %1401 = vdwg.mxu0
  %v1402 = vmax.f32 %v1399, 0.0
  %v1403 = vld [vmem:[%s10 + $0x308] sm:$0xff]
  %v1404 = vld [vmem:[%s10 + $0x310] sm:$0xff]
  %v1405 = vld [vmem:[%s10 + $0x318] sm:$0xff]
  %v1406 = vld [vmem:[%s10 + $0x320] sm:$0xff]
  %v1407 = vld [vmem:[%s10 + $0x328] sm:$0xff]
  %v1408 = vld [vmem:[%s10 + $0x330] sm:$0xff]
  %v1409 = vld [vmem:[%s10 + $0x338] sm:$0xff]
  %v1410 = vld [vmem:[%s10 + $0x340] sm:$0xff]
  %v1411 = vld [vmem:[%s10 + $0x348] sm:$0x1]
  %v1412 = vlaneseq
  %v1413 = vshrl.u32 %v1412, 7
  %v1414 = vsub.s32 0, %v1413
  %v1415 = vrot.slane %v1411, %v1414
  %v1417 = vsel %vm562, %v1402, 0
  %1419 = vmatprep.subr.mxu0 0.0
  %1420 = vmatpush1.msra.mxu0 %v1403
  %1421 = vmatprep.subr.mxu0 0.0
  %1422 = vmatpush1.msra.mxu0 %v1404
  %1423 = vmatprep.subr.mxu0 0.0
  %1424 = vmatpush1.msra.mxu0 %v1405
  %1425 = vmatprep.subr.mxu0 0.0
  %1426 = vmatpush1.msra.mxu0 %v1406
  %1427 = vmatprep.subr.mxu0 0.0
  %1428 = vmatpush1.msra.mxu0 %v1407
  %1429 = vmatprep.subr.mxu0 0.0
  %1430 = vmatpush1.msra.mxu0 %v1408
  %1431 = vmatprep.subr.mxu0 0.0
  %1432 = vmatpush1.msra.mxu0 %v1409
  %1433 = vmatprep.subr.mxu0 0.0
  %1434 = vmatpush1.msra.mxu0 %v1410
  %1435 = vmatprep.subr.mxu0 0.0
  %1436 = vmatpush1.msra.mxu0 0.0
  %1437 = vmatprep.subr.mxu0 0.0
  %1438 = vmatpush1.msra.mxu0 0.0
  %1439 = vmatprep.subr.mxu0 0.0
  %1440 = vmatpush1.msra.mxu0 0.0
  %1441 = vmatprep.subr.mxu0 0.0
  %1442 = vmatpush1.msra.mxu0 0.0
  %1443 = vmatprep.subr.mxu0 0.0
  %1444 = vmatpush1.msra.mxu0 0.0
  %1445 = vmatprep.subr.mxu0 0.0
  %1446 = vmatpush1.msra.mxu0 0.0
  %1447 = vmatprep.subr.mxu0 0.0
  %1448 = vmatpush1.msra.mxu0 0.0
  %1449 = vmatprep.subr.mxu0 0.0
  %1450 = vmatpush1.msra.mxu0 0.0
  %1451 = vmatprep.subr.mxu0 0.0
  %1452 = vmatpush1.msra.mxu0 0.0
  %1453 = vmatprep.subr.mxu0 0.0
  %1454 = vmatpush1.msra.mxu0 0.0
  %1455 = vmatprep.subr.mxu0 0.0
  %1456 = vmatpush1.msra.mxu0 0.0
  %1457 = vmatprep.subr.mxu0 0.0
  %1458 = vmatpush1.msra.mxu0 0.0
  %1459 = vmatprep.subr.mxu0 0.0
  %1460 = vmatpush1.msra.mxu0 0.0
  %1461 = vmatprep.subr.mxu0 0.0
  %1462 = vmatpush1.msra.mxu0 0.0
  %1463 = vmatprep.subr.mxu0 0.0
  %1464 = vmatpush1.msra.mxu0 0.0
  %1465 = vmatprep.subr.mxu0 0.0
  %1466 = vmatpush1.msra.mxu0 0.0
  %1467 = vmatprep.subr.mxu0 0.0
  %1468 = vmatpush1.msra.mxu0 0.0
  %1469 = vmatprep.subr.mxu0 0.0
  %1470 = vmatpush1.msra.mxu0 0.0
  %1471 = vmatprep.subr.mxu0 0.0
  %1472 = vmatpush1.msra.mxu0 0.0
  %1473 = vmatprep.subr.mxu0 0.0
  %1474 = vmatpush1.msra.mxu0 0.0
  %1475 = vmatprep.subr.mxu0 0.0
  %1476 = vmatpush1.msra.mxu0 0.0
  %1477 = vmatprep.subr.mxu0 0.0
  %1478 = vmatpush1.msra.mxu0 0.0
  %1479 = vmatprep.subr.mxu0 0.0
  %1480 = vmatpush1.msra.mxu0 0.0
  %1481 = vmatprep.subr.mxu0 0.0
  %1482 = vmatpush1.msra.mxu0 0.0
  %1483 = vmatprep.mubr.f32.mxu0 0.0
  %1484 = vmatmul.mubr.f32.gmra.mrb[0].mxu0 %v1417
  %v1485 = vpop.f32.mrb[0].mxu0
  %v1486 = vadd.f32 %v1415, %v1485
  %v1487 = vpop.f32.mrb[0].mxu0
  %1488 = vdwg.mxu0
  %v1489 = vmul.f32 %v1486, %v1486
  %1491 = vrot.lane.b32.xlu0 %v1489, 112
  %v1492 = vpop.permute.xlu0 %1491
  %v1494 = vsel %vm1078, %v1492, 0.0
  %1495 = vadd.xlane.f32.xlu0 %v1494
  %v1496 = vpop.xlane.xlu0 %1495
  %v1497 = vmax.f32 %v1496, 1e-24
  %v1498 = vrsqrt.pop %v1497
  %v1499 = vmul.f32 %v1486, %v1498
  %v1500 = vld [vmem:[%s7] sm:$0xff]
  %1502 = vrot.lane.b32.xlu0 %v1499, 112
  %v1503 = vpop.permute.xlu0 %1502
  %vm1505 = vcmask 64512
  %v1507 = vsel %vm1505, %v1500, 0
  %1509 = vmatprep.subr.mxu0 0.0
  %1510 = vmatpush1.msra.mxu0 %v1503
  %1511 = vmatprep.subr.mxu0 0.0
  %1512 = vmatpush1.msra.mxu0 0.0
  %1513 = vmatprep.subr.mxu0 0.0
  %1514 = vmatpush1.msra.mxu0 0.0
  %1515 = vmatprep.subr.mxu0 0.0
  %1516 = vmatpush1.msra.mxu0 0.0
  %1517 = vmatprep.subr.mxu0 0.0
  %1518 = vmatpush1.msra.mxu0 0.0
  %1519 = vmatprep.subr.mxu0 0.0
  %1520 = vmatpush1.msra.mxu0 0.0
  %1521 = vmatprep.subr.mxu0 0.0
  %1522 = vmatpush1.msra.mxu0 0.0
  %1523 = vmatprep.subr.mxu0 0.0
  %1524 = vmatpush1.msra.mxu0 0.0
  %1525 = vmatprep.subr.mxu0 0.0
  %1526 = vmatpush1.msra.mxu0 0.0
  %1527 = vmatprep.subr.mxu0 0.0
  %1528 = vmatpush1.msra.mxu0 0.0
  %1529 = vmatprep.subr.mxu0 0.0
  %1530 = vmatpush1.msra.mxu0 0.0
  %1531 = vmatprep.subr.mxu0 0.0
  %1532 = vmatpush1.msra.mxu0 0.0
  %1533 = vmatprep.subr.mxu0 0.0
  %1534 = vmatpush1.msra.mxu0 0.0
  %1535 = vmatprep.subr.mxu0 0.0
  %1536 = vmatpush1.msra.mxu0 0.0
  %1537 = vmatprep.subr.mxu0 0.0
  %1538 = vmatpush1.msra.mxu0 0.0
  %1539 = vmatprep.subr.mxu0 0.0
  %1540 = vmatpush1.msra.mxu0 0.0
  %1541 = vmatprep.subr.mxu0 0.0
  %1542 = vmatpush1.msra.mxu0 0.0
  %1543 = vmatprep.subr.mxu0 0.0
  %1544 = vmatpush1.msra.mxu0 0.0
  %1545 = vmatprep.subr.mxu0 0.0
  %1546 = vmatpush1.msra.mxu0 0.0
  %1547 = vmatprep.subr.mxu0 0.0
  %1548 = vmatpush1.msra.mxu0 0.0
  %1549 = vmatprep.subr.mxu0 0.0
  %1550 = vmatpush1.msra.mxu0 0.0
  %1551 = vmatprep.subr.mxu0 0.0
  %1552 = vmatpush1.msra.mxu0 0.0
  %1553 = vmatprep.subr.mxu0 0.0
  %1554 = vmatpush1.msra.mxu0 0.0
  %1555 = vmatprep.subr.mxu0 0.0
  %1556 = vmatpush1.msra.mxu0 0.0
  %1557 = vmatprep.subr.mxu0 0.0
  %1558 = vmatpush1.msra.mxu0 0.0
  %1559 = vmatprep.subr.mxu0 0.0
  %1560 = vmatpush1.msra.mxu0 0.0
  %1561 = vmatprep.subr.mxu0 0.0
  %1562 = vmatpush1.msra.mxu0 0.0
  %1563 = vmatprep.subr.mxu0 0.0
  %1564 = vmatpush1.msra.mxu0 0.0
  %1565 = vmatprep.subr.mxu0 0.0
  %1566 = vmatpush1.msra.mxu0 0.0
  %1567 = vmatprep.subr.mxu0 0.0
  %1568 = vmatpush1.msra.mxu0 0.0
  %1569 = vmatprep.subr.mxu0 0.0
  %1570 = vmatpush1.msra.mxu0 0.0
  %1571 = vmatprep.subr.mxu0 0.0
  %1572 = vmatpush1.msra.mxu0 0.0
  %1573 = vmatprep.mubr.f32.mxu0 0.0
  %1574 = vmatmul.mubr.f32.gmra.mrb[0].mxu0 %v1507
  %v1575 = vpop.f32.mrb[0].mxu0
  %v1576 = vadd.f32 0.0, %v1575
  %v1577 = vpop.f32.mrb[0].mxu0
  %1578 = vdwg.mxu0
  %vm1579 = vcmask 130048
  %v1580 = vsel %vm1579, %v1070, -inf
  %1581 = vmax.xlane.f32.xlu0 %v1580
  %v1582 = vpop.xlane.xlu0 %1581
  %v1583 = vsub.f32 %v1070, %v1582
  %v1584 = vmul.f32 %v1583, 1.442695
  %v1585 = vpow.pop %v1584
  %v1586 = vld [vmem:[%s4] sm:$0xff]
  %v1587 = vmul.f32 %v1585, %v1586
  %v1588 = vlaneseq
  %v1589 = vand.u32 %v1588, 127
  %v1590 = vsel %vm1579, %v1587, -inf
  %1591 = vmax.xlane.f32.xlu0 %v1590
  %v1592 = vpop.xlane.xlu0 %1591
  %vm1593 = vcmp.eq.f32.partialorder %v1587, %v1592
  %v1594 = vsel %vm1593, %v1589, 16
  %v1595 = vsel %vm1579, %v1594, 2147483647
  %v1596 = vand.u32 %v1595, 65535
  %v1597 = vshra.s32 %v1595, 16
  %v1598 = vcvt.s32.f32 %v1596
  %v1599 = vcvt.s32.f32 %v1597
  %1600 = vmin.xlane.f32.xlu0 %v1599
  %v1601 = vpop.xlane.xlu0 %1600
  %vm1602 = vcmp.eq.f32.partialorder %v1599, %v1601
  %v1603 = vsel %vm1602, %v1598, inf
  %1604 = vmin.xlane.f32.xlu0 %v1603
  %v1605 = vpop.xlane.xlu0 %1604
  %v1606 = vcvt.f32.s32 %v1605
  %v1607 = vcvt.f32.s32 %v1601
  %v1608 = vshll.u32 %v1607, 16
  %v1609 = vadd.s32 %v1608, %v1606
  %v1610 = vld [vmem:[%s5] sm:$0xff]
  %v1611 = vld [vmem:[%s5 + $0x8] sm:$0xff]
  %1613 = vrot.lane.b32.xlu0 %v1084, 112
  %v1614 = vpop.permute.xlu0 %1613
  %v1615 = vsel %vm1078, %v1614, 0
  %v1618 = vsel %vm1078, %v1610, 0
  %v1621 = vsel %vm1078, %v1611, 0
  %1623 = vmatprep.subr.mxu0 0.0
  %1624 = vmatpush1.xpose.msra.mxu0 %v1618
  %1625 = vmatprep.subr.mxu0 0.0
  %1626 = vmatpush1.xpose.msra.mxu0 %v1621
  %1627 = vmatprep.subr.mxu0 0.0
  %1628 = vmatpush1.xpose.msra.mxu0 0.0
  %1629 = vmatprep.subr.mxu0 0.0
  %1630 = vmatpush1.xpose.msra.mxu0 0.0
  %1631 = vmatprep.subr.mxu0 0.0
  %1632 = vmatpush1.xpose.msra.mxu0 0.0
  %1633 = vmatprep.subr.mxu0 0.0
  %1634 = vmatpush1.xpose.msra.mxu0 0.0
  %1635 = vmatprep.subr.mxu0 0.0
  %1636 = vmatpush1.xpose.msra.mxu0 0.0
  %1637 = vmatprep.subr.mxu0 0.0
  %1638 = vmatpush1.xpose.msra.mxu0 0.0
  %1639 = vmatprep.subr.mxu0 0.0
  %1640 = vmatpush1.xpose.msra.mxu0 0.0
  %1641 = vmatprep.subr.mxu0 0.0
  %1642 = vmatpush1.xpose.msra.mxu0 0.0
  %1643 = vmatprep.subr.mxu0 0.0
  %1644 = vmatpush1.xpose.msra.mxu0 0.0
  %1645 = vmatprep.subr.mxu0 0.0
  %1646 = vmatpush1.xpose.msra.mxu0 0.0
  %1647 = vmatprep.subr.mxu0 0.0
  %1648 = vmatpush1.xpose.msra.mxu0 0.0
  %1649 = vmatprep.subr.mxu0 0.0
  %1650 = vmatpush1.xpose.msra.mxu0 0.0
  %1651 = vmatprep.subr.mxu0 0.0
  %1652 = vmatpush1.xpose.msra.mxu0 0.0
  %1653 = vmatprep.subr.mxu0 0.0
  %1654 = vmatpush1.xpose.msra.mxu0 0.0
  %1655 = vmatprep.subr.mxu0 0.0
  %1656 = vmatpush1.xpose.msra.mxu0 0.0
  %1657 = vmatprep.subr.mxu0 0.0
  %1658 = vmatpush1.xpose.msra.mxu0 0.0
  %1659 = vmatprep.subr.mxu0 0.0
  %1660 = vmatpush1.xpose.msra.mxu0 0.0
  %1661 = vmatprep.subr.mxu0 0.0
  %1662 = vmatpush1.xpose.msra.mxu0 0.0
  %1663 = vmatprep.subr.mxu0 0.0
  %1664 = vmatpush1.xpose.msra.mxu0 0.0
  %1665 = vmatprep.subr.mxu0 0.0
  %1666 = vmatpush1.xpose.msra.mxu0 0.0
  %1667 = vmatprep.subr.mxu0 0.0
  %1668 = vmatpush1.xpose.msra.mxu0 0.0
  %1669 = vmatprep.subr.mxu0 0.0
  %1670 = vmatpush1.xpose.msra.mxu0 0.0
  %1671 = vmatprep.subr.mxu0 0.0
  %1672 = vmatpush1.xpose.msra.mxu0 0.0
  %1673 = vmatprep.subr.mxu0 0.0
  %1674 = vmatpush1.xpose.msra.mxu0 0.0
  %1675 = vmatprep.subr.mxu0 0.0
  %1676 = vmatpush1.xpose.msra.mxu0 0.0
  %1677 = vmatprep.subr.mxu0 0.0
  %1678 = vmatpush1.xpose.msra.mxu0 0.0
  %1679 = vmatprep.subr.mxu0 0.0
  %1680 = vmatpush1.xpose.msra.mxu0 0.0
  %1681 = vmatprep.subr.mxu0 0.0
  %1682 = vmatpush1.xpose.msra.mxu0 0.0
  %1683 = vmatprep.subr.mxu0 0.0
  %1684 = vmatpush1.xpose.msra.mxu0 0.0
  %1685 = vmatprep.subr.mxu0 0.0
  %1686 = vmatpush1.xpose.msra.mxu0 0.0
  %1687 = vmatprep.mubr.f32.mxu0 0.0
  %1688 = vmatmul.mubr.f32.gmra.mrb[0].mxu0 %v1615
  %v1689 = vpop.f32.mrb[0].mxu0
  %v1690 = vadd.f32 0.0, %v1689
  %v1691 = vpop.f32.mrb[0].mxu0
  %1692 = vdwg.mxu0
  %v1693 = vsel %vm1579, %v1690, -inf
  %1694 = vmax.xlane.f32.xlu0 %v1693
  %v1695 = vpop.xlane.xlu0 %1694
  %v1696 = vsub.f32 %v1690, %v1695
  %v1697 = vmul.f32 %v1696, 1.442695
  %v1698 = vpow.pop %v1697
  %v1699 = vsel %vm1579, %v1698, 0.0
  %1700 = vadd.xlane.f32.xlu0 %v1699
  %v1701 = vpop.xlane.xlu0 %1700
  %v1702 = vrcp.pop %v1701
  %v1703 = vmul.f32 %v1698, %v1702
  %vm1704 = vcmp.eq.s32.totalorder %v1589, %v1609
  %v1705 = vsel %vm1704, 1, 0
  %v1706 = vcvt.s32.f32 %v1705
  %v1707 = vmul.f32 %v1690, %v1706
  %v1708 = vsel %vm1579, %v1707, 0.0
  %1709 = vadd.xlane.f32.xlu0 %v1708
  %v1710 = vpop.xlane.xlu0 %1709
  %v1711 = vsub.f32 0.0, %v1710
  %v1712 = vlaneseq
  %v1713 = vshrl.u32 %v1712, 7
  %v1714 = vadd.s32 %v1713, 8
  %v1715 = vld [vmem:[%s6] sm:$0x1]
  %v1716 = vlaneseq
  %v1717 = vshrl.u32 %v1716, 7
  %v1718 = vsub.s32 0, %v1717
  %v1719 = vrot.slane %v1609, %v1718
  %vm1720 = vcmp.eq.s32.totalorder %v1713, %v1719
  %vm1721 = vcmp.eq.s32.totalorder %v1714, %v1719
  %vm1722 = vcmp.gt.f32.partialorder %v1715, 0.5
  %v1723 = vsel %vm1722, 1, 0
  %v1724 = vlaneseq
  %v1725 = vshrl.u32 %v1724, 7
  %v1726 = vsub.s32 0, %v1725
  %v1727 = vrot.slane %v1723, %v1726
  %vm1728 = vcmp.eq.s32.totalorder %v1727, 1
  %vm1729 = vmand %vm1720, %vm1728
  %vm1730 = vmand %vm1721, %vm1728
  %v1731 = vmul.f32 %v1610, 0.99
  %v1732 = vmul.f32 %v1611, 0.99
  %v1733 = vmul.f32 %v1084, 0.01
  %v1734 = vlaneseq
  %v1735 = vshrl.u32 %v1734, 7
  %v1736 = vsub.s32 0, %v1735
  %v1737 = vrot.slane %v1733, %v1736
  %1739 = vrot.lane.b32.xlu0 %v1737, 112
  %v1740 = vpop.permute.xlu0 %1739
  %v1742 = vadd.f32 %v1731, %v1740
  %v1743 = vadd.f32 %v1732, %v1740
  %v1744 = vsel %vm1729, 1, 0
  %v1745 = vsel %vm1730, 1, 0
  %1746 = vset.pattern.permute.xlu0 0
  %1747 = vperm.xlu0 %1746, %v1744
  %v1748 = vpop.permute.xlu0 %1747
  %1749 = vset.pattern.permute.xlu0 0
  %1750 = vperm.xlu0 %1749, %v1745
  %v1751 = vpop.permute.xlu0 %1750
  %vm1752 = vcmp.eq.s32.totalorder %v1748, 1
  %vm1753 = vcmp.eq.s32.totalorder %v1751, 1
  %v1754 = vsel %vm1752, %v1742, %v1610
  %v1755 = vsel %vm1753, %v1743, %v1611
  %v1756 = vld [vmem:[%s6 + $0x1] sm:$0x1]
  %v1757 = vlaneseq
  %v1758 = vshrl.u32 %v1757, 7
  %v1759 = vsub.s32 1, %v1758
  %v1760 = vrot.slane %v1609, %v1759
  %vm1761 = vcmp.eq.s32.totalorder %v1713, %v1760
  %vm1762 = vcmp.eq.s32.totalorder %v1714, %v1760
  %vm1763 = vcmp.gt.f32.partialorder %v1756, 0.5
  %v1764 = vsel %vm1763, 1, 0
  %v1765 = vlaneseq
  %v1766 = vshrl.u32 %v1765, 7
  %v1767 = vsub.s32 0, %v1766
  %v1768 = vrot.slane %v1764, %v1767
  %vm1769 = vcmp.eq.s32.totalorder %v1768, 1
  %vm1770 = vmand %vm1761, %vm1769
  %vm1771 = vmand %vm1762, %vm1769
  %v1772 = vmul.f32 %v1754, 0.99
  %v1773 = vmul.f32 %v1755, 0.99
  %v1774 = vlaneseq
  %v1775 = vshrl.u32 %v1774, 7
  %v1776 = vsub.s32 1, %v1775
  %v1777 = vrot.slane %v1733, %v1776
  %1779 = vrot.lane.b32.xlu0 %v1777, 112
  %v1780 = vpop.permute.xlu0 %1779
  %v1782 = vadd.f32 %v1772, %v1780
  %v1783 = vadd.f32 %v1773, %v1780
  %v1784 = vsel %vm1770, 1, 0
  %v1785 = vsel %vm1771, 1, 0
  %1786 = vset.pattern.permute.xlu0 0
  %1787 = vperm.xlu0 %1786, %v1784
  %v1788 = vpop.permute.xlu0 %1787
  %1789 = vset.pattern.permute.xlu0 0
  %1790 = vperm.xlu0 %1789, %v1785
  %v1791 = vpop.permute.xlu0 %1790
  %vm1792 = vcmp.eq.s32.totalorder %v1788, 1
  %vm1793 = vcmp.eq.s32.totalorder %v1791, 1
  %v1794 = vsel %vm1792, %v1782, %v1754
  %v1795 = vsel %vm1793, %v1783, %v1755
  %v1796 = vld [vmem:[%s6 + $0x2] sm:$0x1]
  %v1797 = vlaneseq
  %v1798 = vshrl.u32 %v1797, 7
  %v1799 = vsub.s32 2, %v1798
  %v1800 = vrot.slane %v1609, %v1799
  %vm1801 = vcmp.eq.s32.totalorder %v1713, %v1800
  %vm1802 = vcmp.eq.s32.totalorder %v1714, %v1800
  %vm1803 = vcmp.gt.f32.partialorder %v1796, 0.5
  %v1804 = vsel %vm1803, 1, 0
  %v1805 = vlaneseq
  %v1806 = vshrl.u32 %v1805, 7
  %v1807 = vsub.s32 0, %v1806
  %v1808 = vrot.slane %v1804, %v1807
  %vm1809 = vcmp.eq.s32.totalorder %v1808, 1
  %vm1810 = vmand %vm1801, %vm1809
  %vm1811 = vmand %vm1802, %vm1809
  %v1812 = vmul.f32 %v1794, 0.99
  %v1813 = vmul.f32 %v1795, 0.99
  %v1814 = vlaneseq
  %v1815 = vshrl.u32 %v1814, 7
  %v1816 = vsub.s32 2, %v1815
  %v1817 = vrot.slane %v1733, %v1816
  %1819 = vrot.lane.b32.xlu0 %v1817, 112
  %v1820 = vpop.permute.xlu0 %1819
  %v1822 = vadd.f32 %v1812, %v1820
  %v1823 = vadd.f32 %v1813, %v1820
  %v1824 = vsel %vm1810, 1, 0
  %v1825 = vsel %vm1811, 1, 0
  %1826 = vset.pattern.permute.xlu0 0
  %1827 = vperm.xlu0 %1826, %v1824
  %v1828 = vpop.permute.xlu0 %1827
  %1829 = vset.pattern.permute.xlu0 0
  %1830 = vperm.xlu0 %1829, %v1825
  %v1831 = vpop.permute.xlu0 %1830
  %vm1832 = vcmp.eq.s32.totalorder %v1828, 1
  %vm1833 = vcmp.eq.s32.totalorder %v1831, 1
  %v1834 = vsel %vm1832, %v1822, %v1794
  %v1835 = vsel %vm1833, %v1823, %v1795
  %v1836 = vld [vmem:[%s6 + $0x3] sm:$0x1]
  %v1837 = vlaneseq
  %v1838 = vshrl.u32 %v1837, 7
  %v1839 = vsub.s32 3, %v1838
  %v1840 = vrot.slane %v1609, %v1839
  %vm1841 = vcmp.eq.s32.totalorder %v1713, %v1840
  %vm1842 = vcmp.eq.s32.totalorder %v1714, %v1840
  %vm1843 = vcmp.gt.f32.partialorder %v1836, 0.5
  %v1844 = vsel %vm1843, 1, 0
  %v1845 = vlaneseq
  %v1846 = vshrl.u32 %v1845, 7
  %v1847 = vsub.s32 0, %v1846
  %v1848 = vrot.slane %v1844, %v1847
  %vm1849 = vcmp.eq.s32.totalorder %v1848, 1
  %vm1850 = vmand %vm1841, %vm1849
  %vm1851 = vmand %vm1842, %vm1849
  %v1852 = vmul.f32 %v1834, 0.99
  %v1853 = vmul.f32 %v1835, 0.99
  %v1854 = vlaneseq
  %v1855 = vshrl.u32 %v1854, 7
  %v1856 = vsub.s32 3, %v1855
  %v1857 = vrot.slane %v1733, %v1856
  %1859 = vrot.lane.b32.xlu0 %v1857, 112
  %v1860 = vpop.permute.xlu0 %1859
  %v1862 = vadd.f32 %v1852, %v1860
  %v1863 = vadd.f32 %v1853, %v1860
  %v1864 = vsel %vm1850, 1, 0
  %v1865 = vsel %vm1851, 1, 0
  %1866 = vset.pattern.permute.xlu0 0
  %1867 = vperm.xlu0 %1866, %v1864
  %v1868 = vpop.permute.xlu0 %1867
  %1869 = vset.pattern.permute.xlu0 0
  %1870 = vperm.xlu0 %1869, %v1865
  %v1871 = vpop.permute.xlu0 %1870
  %vm1872 = vcmp.eq.s32.totalorder %v1868, 1
  %vm1873 = vcmp.eq.s32.totalorder %v1871, 1
  %v1874 = vsel %vm1872, %v1862, %v1834
  %v1875 = vsel %vm1873, %v1863, %v1835
  %v1876 = vld [vmem:[%s6 + $0x4] sm:$0x1]
  %v1877 = vlaneseq
  %v1878 = vshrl.u32 %v1877, 7
  %v1879 = vsub.s32 4, %v1878
  %v1880 = vrot.slane %v1609, %v1879
  %vm1881 = vcmp.eq.s32.totalorder %v1713, %v1880
  %vm1882 = vcmp.eq.s32.totalorder %v1714, %v1880
  %vm1883 = vcmp.gt.f32.partialorder %v1876, 0.5
  %v1884 = vsel %vm1883, 1, 0
  %v1885 = vlaneseq
  %v1886 = vshrl.u32 %v1885, 7
  %v1887 = vsub.s32 0, %v1886
  %v1888 = vrot.slane %v1884, %v1887
  %vm1889 = vcmp.eq.s32.totalorder %v1888, 1
  %vm1890 = vmand %vm1881, %vm1889
  %vm1891 = vmand %vm1882, %vm1889
  %v1892 = vmul.f32 %v1874, 0.99
  %v1893 = vmul.f32 %v1875, 0.99
  %v1894 = vlaneseq
  %v1895 = vshrl.u32 %v1894, 7
  %v1896 = vsub.s32 4, %v1895
  %v1897 = vrot.slane %v1733, %v1896
  %1899 = vrot.lane.b32.xlu0 %v1897, 112
  %v1900 = vpop.permute.xlu0 %1899
  %v1902 = vadd.f32 %v1892, %v1900
  %v1903 = vadd.f32 %v1893, %v1900
  %v1904 = vsel %vm1890, 1, 0
  %v1905 = vsel %vm1891, 1, 0
  %1906 = vset.pattern.permute.xlu0 0
  %1907 = vperm.xlu0 %1906, %v1904
  %v1908 = vpop.permute.xlu0 %1907
  %1909 = vset.pattern.permute.xlu0 0
  %1910 = vperm.xlu0 %1909, %v1905
  %v1911 = vpop.permute.xlu0 %1910
  %vm1912 = vcmp.eq.s32.totalorder %v1908, 1
  %vm1913 = vcmp.eq.s32.totalorder %v1911, 1
  %v1914 = vsel %vm1912, %v1902, %v1874
  %v1915 = vsel %vm1913, %v1903, %v1875
  %v1916 = vld [vmem:[%s6 + $0x5] sm:$0x1]
  %v1917 = vlaneseq
  %v1918 = vshrl.u32 %v1917, 7
  %v1919 = vsub.s32 5, %v1918
  %v1920 = vrot.slane %v1609, %v1919
  %vm1921 = vcmp.eq.s32.totalorder %v1713, %v1920
  %vm1922 = vcmp.eq.s32.totalorder %v1714, %v1920
  %vm1923 = vcmp.gt.f32.partialorder %v1916, 0.5
  %v1924 = vsel %vm1923, 1, 0
  %v1925 = vlaneseq
  %v1926 = vshrl.u32 %v1925, 7
  %v1927 = vsub.s32 0, %v1926
  %v1928 = vrot.slane %v1924, %v1927
  %vm1929 = vcmp.eq.s32.totalorder %v1928, 1
  %vm1930 = vmand %vm1921, %vm1929
  %vm1931 = vmand %vm1922, %vm1929
  %v1932 = vmul.f32 %v1914, 0.99
  %v1933 = vmul.f32 %v1915, 0.99
  %v1934 = vlaneseq
  %v1935 = vshrl.u32 %v1934, 7
  %v1936 = vsub.s32 5, %v1935
  %v1937 = vrot.slane %v1733, %v1936
  %1939 = vrot.lane.b32.xlu0 %v1937, 112
  %v1940 = vpop.permute.xlu0 %1939
  %v1942 = vadd.f32 %v1932, %v1940
  %v1943 = vadd.f32 %v1933, %v1940
  %v1944 = vsel %vm1930, 1, 0
  %v1945 = vsel %vm1931, 1, 0
  %1946 = vset.pattern.permute.xlu0 0
  %1947 = vperm.xlu0 %1946, %v1944
  %v1948 = vpop.permute.xlu0 %1947
  %1949 = vset.pattern.permute.xlu0 0
  %1950 = vperm.xlu0 %1949, %v1945
  %v1951 = vpop.permute.xlu0 %1950
  %vm1952 = vcmp.eq.s32.totalorder %v1948, 1
  %vm1953 = vcmp.eq.s32.totalorder %v1951, 1
  %v1954 = vsel %vm1952, %v1942, %v1914
  %v1955 = vsel %vm1953, %v1943, %v1915
  %v1956 = vld [vmem:[%s6 + $0x6] sm:$0x1]
  %v1957 = vlaneseq
  %v1958 = vshrl.u32 %v1957, 7
  %v1959 = vsub.s32 6, %v1958
  %v1960 = vrot.slane %v1609, %v1959
  %vm1961 = vcmp.eq.s32.totalorder %v1713, %v1960
  %vm1962 = vcmp.eq.s32.totalorder %v1714, %v1960
  %vm1963 = vcmp.gt.f32.partialorder %v1956, 0.5
  %v1964 = vsel %vm1963, 1, 0
  %v1965 = vlaneseq
  %v1966 = vshrl.u32 %v1965, 7
  %v1967 = vsub.s32 0, %v1966
  %v1968 = vrot.slane %v1964, %v1967
  %vm1969 = vcmp.eq.s32.totalorder %v1968, 1
  %vm1970 = vmand %vm1961, %vm1969
  %vm1971 = vmand %vm1962, %vm1969
  %v1972 = vmul.f32 %v1954, 0.99
  %v1973 = vmul.f32 %v1955, 0.99
  %v1974 = vlaneseq
  %v1975 = vshrl.u32 %v1974, 7
  %v1976 = vsub.s32 6, %v1975
  %v1977 = vrot.slane %v1733, %v1976
  %1979 = vrot.lane.b32.xlu0 %v1977, 112
  %v1980 = vpop.permute.xlu0 %1979
  %v1982 = vadd.f32 %v1972, %v1980
  %v1983 = vadd.f32 %v1973, %v1980
  %v1984 = vsel %vm1970, 1, 0
  %v1985 = vsel %vm1971, 1, 0
  %1986 = vset.pattern.permute.xlu0 0
  %1987 = vperm.xlu0 %1986, %v1984
  %v1988 = vpop.permute.xlu0 %1987
  %1989 = vset.pattern.permute.xlu0 0
  %1990 = vperm.xlu0 %1989, %v1985
  %v1991 = vpop.permute.xlu0 %1990
  %vm1992 = vcmp.eq.s32.totalorder %v1988, 1
  %vm1993 = vcmp.eq.s32.totalorder %v1991, 1
  %v1994 = vsel %vm1992, %v1982, %v1954
  %v1995 = vsel %vm1993, %v1983, %v1955
  %v1996 = vld [vmem:[%s6 + $0x7] sm:$0x1]
  %v1997 = vlaneseq
  %v1998 = vshrl.u32 %v1997, 7
  %v1999 = vsub.s32 7, %v1998
  %v2000 = vrot.slane %v1609, %v1999
  %vm2001 = vcmp.eq.s32.totalorder %v1713, %v2000
  %vm2002 = vcmp.eq.s32.totalorder %v1714, %v2000
  %vm2003 = vcmp.gt.f32.partialorder %v1996, 0.5
  %v2004 = vsel %vm2003, 1, 0
  %v2005 = vlaneseq
  %v2006 = vshrl.u32 %v2005, 7
  %v2007 = vsub.s32 0, %v2006
  %v2008 = vrot.slane %v2004, %v2007
  %vm2009 = vcmp.eq.s32.totalorder %v2008, 1
  %vm2010 = vmand %vm2001, %vm2009
  %vm2011 = vmand %vm2002, %vm2009
  %v2012 = vmul.f32 %v1994, 0.99
  %v2013 = vmul.f32 %v1995, 0.99
  %v2014 = vlaneseq
  %v2015 = vshrl.u32 %v2014, 7
  %v2016 = vsub.s32 7, %v2015
  %v2017 = vrot.slane %v1733, %v2016
  %2019 = vrot.lane.b32.xlu0 %v2017, 112
  %v2020 = vpop.permute.xlu0 %2019
  %v2022 = vadd.f32 %v2012, %v2020
  %v2023 = vadd.f32 %v2013, %v2020
  %v2024 = vsel %vm2010, 1, 0
  %v2025 = vsel %vm2011, 1, 0
  %2026 = vset.pattern.permute.xlu0 0
  %2027 = vperm.xlu0 %2026, %v2024
  %v2028 = vpop.permute.xlu0 %2027
  %2029 = vset.pattern.permute.xlu0 0
  %2030 = vperm.xlu0 %2029, %v2025
  %v2031 = vpop.permute.xlu0 %2030
  %vm2032 = vcmp.eq.s32.totalorder %v2028, 1
  %vm2033 = vcmp.eq.s32.totalorder %v2031, 1
  %v2034 = vsel %vm2032, %v2022, %v1994
  %v2035 = vsel %vm2033, %v2023, %v1995
  %v2036 = vmul.f32 %v2034, %v2034
  %v2037 = vmul.f32 %v2035, %v2035
  %v2038 = vsel %vm1078, %v2036, 0.0
  %2039 = vadd.xlane.f32.xlu0 %v2038
  %v2040 = vpop.xlane.xlu0 %2039
  %v2041 = vsel %vm1078, %v2037, 0.0
  %2042 = vadd.xlane.f32.xlu0 %v2041
  %v2043 = vpop.xlane.xlu0 %2042
  %v2044 = vmax.f32 %v2040, 1e-24
  %v2045 = vmax.f32 %v2043, 1e-24
  %v2046 = vrsqrt.pop %v2044
  %v2047 = vrsqrt.pop %v2045
  %v2048 = vmul.f32 %v2034, %v2046
  %v2049 = vmul.f32 %v2035, %v2047
  %2050 = vst.msk [vmem:[%s9] sm:$0xff] %vm1078, %v2048
  %2051 = vst.msk [vmem:[%s9 + $0x8] sm:$0xff] %vm1078, %v2049
  %v2052 = vcvt.s32.f32 %v1609
  %2054 = vrot.lane.b32.xlu0 %v1576, 48
  %v2055 = vpop.permute.xlu0 %2054
  %2058 = vrot.lane.b32.xlu0 %v1703, 80
  %v2059 = vpop.permute.xlu0 %2058
  %v2061 = vsel %vm1579, %v1070, %v1084
  %vm2062 = vcmask 392192
  %v2063 = vsel %vm2062, %v2061, %v2055
  %vm2064 = vcmask 654336
  %v2065 = vsel %vm2064, %v2063, %v2059
  %vm2066 = vcmask 785408
  %v2067 = vsel %vm2066, %v2065, %v1711
  %vm2068 = vcmask 793600
  %v2069 = vsel %vm2068, %v2067, %v2052
  %vm2070 = vcmask 801792
  %v2071 = vsel %vm2070, %v2069, 0.0
  %2072 = vst [vmem:[%s8] sm:$0xff] %v2071
  // Predicated region
  $region34: #{pico_plus_forward.1} parent=0 // pred_check
    _
  $region35: #{pico_plus_forward.1} parent=0 // pred_check_branch
    %2074 = sbr.rel (0) target = $region37
  $region36: #{pico_plus_forward.1} parent=0 // pred_region
    _
  $region37: #{pico_plus_forward.1} parent=0 // pred_fallthru
    _
  // Predicated region
  $region38: #{pico_plus_forward.1} parent=0 // pred_check
    _
  $region39: #{pico_plus_forward.1} parent=0 // pred_check_branch
    %2076 = sbr.rel (0) target = $region41
  $region40: #{pico_plus_forward.1} parent=0 // pred_region
    _
  $region41: #{pico_plus_forward.1} parent=0 // pred_fallthru
    _
  // Predicated region
  $region42: #{pico_plus_forward.1} parent=0 // pred_check
    _
  $region43: #{pico_plus_forward.1} parent=0 // pred_check_branch
    %2078 = sbr.rel (0) target = $region45
  $region44: #{pico_plus_forward.1} parent=0 // pred_region
    _
  $region45: #{pico_plus_forward.1} parent=0 // pred_fallthru
    _
  // Predicated region
  $region46: #{pico_plus_forward.1} parent=0 // pred_check
    _
  $region47: #{pico_plus_forward.1} parent=0 // pred_check_branch
    %2080 = sbr.rel (0) target = $region49
  $region48: #{pico_plus_forward.1} parent=0 // pred_region
    _
  $region49: #{pico_plus_forward.1} parent=0 // pred_fallthru
    _
  // Predicated region
  $region50: #{pico_plus_forward.1} parent=0 // pred_check
    _
  $region51: #{pico_plus_forward.1} parent=0 // pred_check_branch
    %2082 = sbr.rel (0) target = $region53
  $region52: #{pico_plus_forward.1} parent=0 // pred_region
    _
  $region53: #{pico_plus_forward.1} parent=0 // pred_fallthru
    _
  // Predicated region
  $region54: #{pico_plus_forward.1} parent=0 // pred_check
    _
  $region55: #{pico_plus_forward.1} parent=0 // pred_check_branch
    %2084 = sbr.rel (0) target = $region57
  $region56: #{pico_plus_forward.1} parent=0 // pred_region
    _
  $region57: #{pico_plus_forward.1} parent=0 // pred_fallthru
    _

</llo_original>
